<compile_context>
chip_gen: v7x
topology: tpu7x:2x2x1
jax: 0.10.0
libtpu: 0.0.40
codegen_flags: <defaults>
</compile_context>

<pallas_src>
import functools

import numpy as np
import jax
import jax.numpy as jnp
from jax import lax
from jax.experimental import pallas as pl
from jax.experimental.pallas import tpu as pltpu


def compute_same_padding(kernel_size: int, dilation: int, stride: int = 1):
    k_eff = dilation * (kernel_size - 1) + 1
    total_pad = k_eff - 1
    pad_left = total_pad // 2
    pad_right = total_pad - pad_left
    return pad_left, pad_right


def _default_min_grid_steps():
    # v7x has 2 TensorCores sharing the grid under "parallel" semantics ->
    # need >=2 steps per core; single-TC chips (v5e/v6e) only need ~2 total
    # for prefetch/writeback overlap (extra steps are pure overhead there).
    try:
        kind = jax.devices()[0].device_kind.lower()
    except Exception:
        kind = ""
    return 4 if "v7" in kind else 2


def _pick_batch_tile(B, C, L, kernel_size, *, itemsize=4,
                     vmem_budget_bytes=24 * 1024 * 1024,
                     target_min_steps=None):
    """Largest batch tile that fits the VMEM budget, honoring a minimum grid-step count."""
    if target_min_steps is None:
        target_min_steps = _default_min_grid_steps()

    def vmem_estimate(bt):
        W = bt * L
        pipeline = 2 * 2 * C * W * itemsize                   # in + out blocks, double-buffered
        consts = 2 * (2 * W * bt + C * C + 2 * kernel_size * C * C + 4 * C) * itemsize
        temps = (kernel_size + 6) * C * W * itemsize          # taps/stacked/d/broadcasts/x/h
        return pipeline + consts + temps

    candidates = [bt for bt in range(1, B + 1)
                  if B % bt == 0
                  and (bt == B or (bt * L) % 128 == 0)
                  and vmem_estimate(bt) <= vmem_budget_bytes]
    if not candidates:
        candidates = [1]
    preferred = [bt for bt in candidates if B // bt >= target_min_steps]
    return max(preferred) if preferred else max(candidates)


def _residual_block_kernel(x_ref, msel_ref, mselt_ref, pn_ref,
                           g1_ref, b1_ref, w1_ref, g2_ref, b2_ref, w2_ref,
                           o_ref, *, kernel_size, dilation, pad_left, L, eps,
                           matmul_dtype):
    C, W = x_ref.shape                  # W = batch_tile * L (lane-fused samples)
    bt = msel_ref.shape[1]
    x = x_ref[...]                      # (C, W) f32

    pn = pn_ref[...]                    # (C, C)  same-group membership / (group_size * L)
    if bt > 1:
        msel = msel_ref[...]            # (W, bt) lane -> sample selector
        mselt = mselt_ref[...]          # (bt, W) sample -> lane broadcaster

        def lane_sum(t):                # (C, W) -> (C, bt) per-sample lane sums (MXU)
            return jnp.dot(t, msel, preferred_element_type=jnp.float32)

        def lane_bcast(t):              # (C, bt) -> (C, W) per-sample broadcast (MXU)
            return jnp.dot(t, mselt, preferred_element_type=jnp.float32)
    else:
        def lane_sum(t):
            return jnp.sum(t, axis=1, keepdims=True)

        def lane_bcast(t):              # (C, 1) broadcasts along lanes for free
            return t

    # Per-tap validity masks: zero positions where a dilated tap would read
    # across a sample boundary / outside the 'same'-padding window.
    lane = lax.broadcasted_iota(jnp.int32, (1, W), 1) % L
    offsets = [k * dilation - pad_left for k in range(kernel_size)]
    masks = {o: jnp.logical_and(lane + o >= 0, lane + o < L)
             for o in offsets if o != 0}

    def group_norm_relu(h, gamma, beta):
        # Centered two-pass GroupNorm (per sample, per group) + folded affine + ReLU.
        # Stats stay in f32; reductions/broadcasts are batched over all samples.
        s = lane_sum(h)                                                     # (C, bt)
        mean_b = lane_bcast(jnp.dot(pn, s, preferred_element_type=jnp.float32))
        d = h - mean_b
        var = jnp.dot(pn, lane_sum(d * d), preferred_element_type=jnp.float32)
        ag_b = lane_bcast(lax.rsqrt(var + eps) * gamma)                     # gamma (C,1)
        return jnp.maximum(d * ag_b + beta, 0.0)                            # beta  (C,1)

    def conv_same(h, w_ref):
        # 'same'-padded dilated Conv1d (bias=False) over all batch_tile samples
        # at once: K shifted taps via XLU rolls + boundary masks, then a single
        # (C_out, K*C_in) @ (K*C_in, bt*L) MXU matmul (bf16 operands, f32 acc).
        taps = []
        for o in offsets:
            if o == 0:
                taps.append(h)
            else:
                t = pltpu.roll(h, (-o) % W, axis=1)
                taps.append(jnp.where(masks[o], t, 0.0))
        stacked = taps[0] if len(taps) == 1 else jnp.concatenate(taps, axis=0)
        return jnp.dot(w_ref[...], stacked.astype(matmul_dtype),
                       preferred_element_type=jnp.float32)

    h = group_norm_relu(x, g1_ref[...], b1_ref[...])
    h = conv_same(h, w1_ref)
    h = group_norm_relu(h, g2_ref[...], b2_ref[...])
    h = conv_same(h, w2_ref)
    # TODO(synk): stride-2 downsample path (in_channels != out_channels: strided
    # conv1 + 1x1 strided shortcut) and FiLM conditioning are not implemented.
    o_ref[...] = (x + h).astype(o_ref.dtype)


def residual_block(x, params, *, kernel_size, dilation, num_groups,
                   batch_tile=None, matmul_dtype=jnp.bfloat16, eps=1e-5):
    B, C, L = x.shape
    pad_left, _ = compute_same_padding(kernel_size, dilation)
    g1, b1, w1, g2, b2, w2 = params            # conv weights given as (K, C_out, C_in)

    if batch_tile is None:
        batch_tile = _pick_batch_tile(B, C, L, kernel_size)
    if B % batch_tile != 0:
        raise ValueError(f"batch_tile={batch_tile} must divide B={B}")
    if batch_tile != B and (batch_tile * L) % 128 != 0:
        # TODO(synk): pad ragged L up to a multiple of 128 host-side for production shapes.
        raise ValueError("batch_tile*L must be a multiple of 128 (or batch_tile == B)")

    grid_b = B // batch_tile
    W = batch_tile * L

    # Conv taps folded into the contraction dim: (C_out, K*C_in), cast host-side
    # to the MXU operand dtype (halves the weight DMA for bf16).
    w1f = jnp.transpose(w1, (1, 0, 2)).reshape(C, kernel_size * C).astype(matmul_dtype)
    w2f = jnp.transpose(w2, (1, 0, 2)).reshape(C, kernel_size * C).astype(matmul_dtype)

    # Constant selector matrices (host-built, resident across grid steps).
    cg = C // num_groups
    ch = np.arange(C)
    pn = jnp.asarray(((ch[:, None] // cg) == (ch[None, :] // cg)).astype(np.float32)
                     / float(cg * L))                                   # (C, C)
    lane = np.arange(W)
    smp = np.arange(batch_tile)
    msel_np = (lane[:, None] // L == smp[None, :]).astype(np.float32)   # (W, bt)
    msel = jnp.asarray(msel_np)
    mselt = jnp.asarray(np.ascontiguousarray(msel_np.T))                # (bt, W)

    # Lane-fused activation layout: (B, C, L) -> (C, B*L), samples contiguous along lanes.
    xt = jnp.transpose(x, (1, 0, 2)).reshape(C, B * L)

    kernel = functools.partial(
        _residual_block_kernel,
        kernel_size=kernel_size, dilation=dilation, pad_left=pad_left,
        L=L, eps=eps, matmul_dtype=matmul_dtype)

    out_t = pl.pallas_call(
        kernel,
        out_shape=jax.ShapeDtypeStruct((C, B * L), jnp.float32),
        grid_spec=pltpu.PrefetchScalarGridSpec(
            num_scalar_prefetch=0,
            grid=(grid_b,),
            in_specs=[
                pl.BlockSpec((C, W), lambda b: (0, b)),                  # activations
                pl.BlockSpec((W, batch_tile), lambda b: (0, 0)),         # lane->sample selector
                pl.BlockSpec((batch_tile, W), lambda b: (0, 0)),         # sample->lane broadcaster
                pl.BlockSpec((C, C), lambda b: (0, 0)),                  # group matrix / (cg*L)
                pl.BlockSpec((C, 1), lambda b: (0, 0)),                  # gn1 gamma
                pl.BlockSpec((C, 1), lambda b: (0, 0)),                  # gn1 beta
                pl.BlockSpec((C, kernel_size * C), lambda b: (0, 0)),    # conv1 weight
                pl.BlockSpec((C, 1), lambda b: (0, 0)),                  # gn2 gamma
                pl.BlockSpec((C, 1), lambda b: (0, 0)),                  # gn2 beta
                pl.BlockSpec((C, kernel_size * C), lambda b: (0, 0)),    # conv2 weight
            ],
            out_specs=pl.BlockSpec((C, W), lambda b: (0, b)),
        ),
        compiler_params=pltpu.CompilerParams(
            dimension_semantics=("parallel",),
            vmem_limit_bytes=32 * 1024 * 1024),
    )(xt, msel, mselt, pn, g1, b1, w1f, g2, b2, w2f)

    return jnp.transpose(out_t.reshape(C, B, L), (1, 0, 2))


# ---------------- pure-JAX reference (for correctness check) ----------------

def ref_forward(x, params, kernel_size, dilation, num_groups, eps=1e-5):
    g1, b1, w1, g2, b2, w2 = params
    pad_l, pad_r = compute_same_padding(kernel_size, dilation)

    def gn_relu(h, gamma, beta):
        B, C, L = h.shape
        hr = h.reshape(B, num_groups, -1)
        mean = hr.mean(-1, keepdims=True)
        var = ((hr - mean) ** 2).mean(-1, keepdims=True)
        hn = ((hr - mean) / jnp.sqrt(var + eps)).reshape(B, C, L)
        return jnp.maximum(hn * gamma[None, :, :] + beta[None, :, :], 0.0)

    def conv(h, w_koi):
        w = jnp.transpose(w_koi, (1, 2, 0))   # (O, I, K)
        return lax.conv_general_dilated(
            h, w, window_strides=(1,), padding=[(pad_l, pad_r)],
            rhs_dilation=(dilation,), dimension_numbers=('NCH', 'OIH', 'NCH'),
            precision=lax.Precision.HIGHEST)

    h = conv(gn_relu(x, g1, b1), w1)
    h = conv(gn_relu(h, g2, b2), w2)
    return x + h


if __name__ == "__main__":
    B, C, L = 4, 32, 128
    kernel_size, dilation = 3, 2
    gn_group_size = 16
    num_groups = C // gn_group_size   # gn_num_groups = out_channels // gn_group_size

    key = jax.random.PRNGKey(0)
    ks = jax.random.split(key, 7)
    x = jax.random.normal(ks[0], (B, C, L), jnp.float32)
    g1 = 1.0 + 0.1 * jax.random.normal(ks[1], (C, 1), jnp.float32)
    b1 = 0.1 * jax.random.normal(ks[2], (C, 1), jnp.float32)
    w1 = 0.1 * jax.random.normal(ks[3], (kernel_size, C, C), jnp.float32)
    g2 = 1.0 + 0.1 * jax.random.normal(ks[4], (C, 1), jnp.float32)
    b2 = 0.1 * jax.random.normal(ks[5], (C, 1), jnp.float32)
    w2 = 0.1 * jax.random.normal(ks[6], (kernel_size, C, C), jnp.float32)
    params = (g1, b1, w1, g2, b2, w2)

    ref = np.asarray(jax.block_until_ready(
        ref_forward(x, params, kernel_size, dilation, num_groups)))

    # Full-f32 path: tight tolerance (centered GN variance, exact-ish MXU f32 path).
    out_f32 = residual_block(x, params, kernel_size=kernel_size, dilation=dilation,
                             num_groups=num_groups, matmul_dtype=jnp.float32)
    out_f32 = np.asarray(jax.block_until_ready(out_f32))
    np.testing.assert_allclose(out_f32, ref, rtol=2e-4, atol=2e-4)

    # Default bf16-operand MXU path: looser tolerance.
    out_bf16 = residual_block(x, params, kernel_size=kernel_size, dilation=dilation,
                              num_groups=num_groups)
    out_bf16 = np.asarray(jax.block_until_ready(out_bf16))
    np.testing.assert_allclose(out_bf16, ref, rtol=3e-2, atol=3e-2)

    print("KERNEL_OK")
</pallas_src>

<mosaic_0001>
module attributes {stable_mosaic.version = 11 : i64} {
  func.func @_residual_block_kernel(%arg0: i32, %arg1: memref<32x256xf32, #tpu.memory_space<vmem>>, %arg2: memref<256x2xf32, #tpu.memory_space<vmem>>, %arg3: memref<2x256xf32, #tpu.memory_space<vmem>>, %arg4: memref<32x32xf32, #tpu.memory_space<vmem>>, %arg5: memref<32x1xf32, #tpu.memory_space<vmem>>, %arg6: memref<32x1xf32, #tpu.memory_space<vmem>>, %arg7: memref<32x96xf32, #tpu.memory_space<vmem>>, %arg8: memref<32x1xf32, #tpu.memory_space<vmem>>, %arg9: memref<32x1xf32, #tpu.memory_space<vmem>>, %arg10: memref<32x96xf32, #tpu.memory_space<vmem>>, %arg11: memref<32x256xf32, #tpu.memory_space<vmem>>) attributes {dimension_semantics = [#tpu.dimension_semantics<parallel>], iteration_bounds = array<i64: 2>, scalar_prefetch = 0 : i64, scratch_operands = 0 : i64, tpu.core_type = #tpu.core_type<tc>, window_params = [{transform_indices = @transform_0, window_bounds = array<i64: 32, 256>}, {pipeline_mode = #tpu.pipeline_mode<synchronous>, transform_indices = @transform_1, window_bounds = array<i64: 256, 2>}, {pipeline_mode = #tpu.pipeline_mode<synchronous>, transform_indices = @transform_2, window_bounds = array<i64: 2, 256>}, {pipeline_mode = #tpu.pipeline_mode<synchronous>, transform_indices = @transform_3, window_bounds = array<i64: 32, 32>}, {pipeline_mode = #tpu.pipeline_mode<synchronous>, transform_indices = @transform_4, window_bounds = array<i64: 32, 1>}, {pipeline_mode = #tpu.pipeline_mode<synchronous>, transform_indices = @transform_5, window_bounds = array<i64: 32, 1>}, {pipeline_mode = #tpu.pipeline_mode<synchronous>, transform_indices = @transform_6, window_bounds = array<i64: 32, 96>}, {pipeline_mode = #tpu.pipeline_mode<synchronous>, transform_indices = @transform_7, window_bounds = array<i64: 32, 1>}, {pipeline_mode = #tpu.pipeline_mode<synchronous>, transform_indices = @transform_8, window_bounds = array<i64: 32, 1>}, {pipeline_mode = #tpu.pipeline_mode<synchronous>, transform_indices = @transform_9, window_bounds = array<i64: 32, 96>}, {transform_indices = @transform_10, window_bounds = array<i64: 32, 256>}]} {
    %c0 = arith.constant 0 : index
    %c0_0 = arith.constant 0 : index
    %0 = vector.load %arg1[%c0, %c0_0] : memref<32x256xf32, #tpu.memory_space<vmem>>, vector<32x256xf32>
    %c0_1 = arith.constant 0 : index
    %c0_2 = arith.constant 0 : index
    %1 = vector.load %arg4[%c0_1, %c0_2] : memref<32x32xf32, #tpu.memory_space<vmem>>, vector<32x32xf32>
    %c0_3 = arith.constant 0 : index
    %c0_4 = arith.constant 0 : index
    %2 = vector.load %arg2[%c0_3, %c0_4] : memref<256x2xf32, #tpu.memory_space<vmem>>, vector<256x2xf32>
    %c0_5 = arith.constant 0 : index
    %c0_6 = arith.constant 0 : index
    %3 = vector.load %arg3[%c0_5, %c0_6] : memref<2x256xf32, #tpu.memory_space<vmem>>, vector<2x256xf32>
    %4 = tpu.iota {dimensions = array<i32: 1>} : vector<1x256xi32>
    %c128_i32 = arith.constant 128 : i32
    %c0_i32 = arith.constant 0 : i32
    %5 = arith.cmpi eq, %c128_i32, %c0_i32 : i32
    %c1_i32 = arith.constant 1 : i32
    %6 = arith.select %5, %c1_i32, %c128_i32 : i32
    %7 = vector.broadcast %6 : i32 to vector<1x256xi32>
    %8 = arith.remsi %4, %7 : vector<1x256xi32>
    %c0_i32_7 = arith.constant 0 : i32
    %9 = vector.broadcast %c0_i32_7 : i32 to vector<1x256xi32>
    %10 = arith.cmpi ne, %8, %9 : vector<1x256xi32>
    %c0_i32_8 = arith.constant 0 : i32
    %11 = vector.broadcast %c0_i32_8 : i32 to vector<1x256xi32>
    %12 = arith.cmpi slt, %8, %11 : vector<1x256xi32>
    %c0_i32_9 = arith.constant 0 : i32
    %13 = arith.cmpi slt, %6, %c0_i32_9 : i32
    %14 = vector.broadcast %13 : i1 to vector<1x256xi1>
    %15 = vector.broadcast %14 : vector<1x256xi1> to vector<1x256xi1>
    %16 = arith.xori %12, %15 : vector<1x256xi1>
    %17 = arith.andi %16, %10 : vector<1x256xi1>
    %18 = vector.broadcast %6 : i32 to vector<1x256xi32>
    %19 = arith.addi %8, %18 : vector<1x256xi32>
    %20 = arith.select %17, %19, %8 : vector<1x256xi1>, vector<1x256xi32>
    %c-2_i32 = arith.constant -2 : i32
    %21 = vector.broadcast %c-2_i32 : i32 to vector<1x256xi32>
    %22 = arith.addi %20, %21 : vector<1x256xi32>
    %c0_i32_10 = arith.constant 0 : i32
    %23 = vector.broadcast %c0_i32_10 : i32 to vector<1x256xi32>
    %24 = arith.cmpi sge, %22, %23 : vector<1x256xi32>
    %c-2_i32_11 = arith.constant -2 : i32
    %25 = vector.broadcast %c-2_i32_11 : i32 to vector<1x256xi32>
    %26 = arith.addi %20, %25 : vector<1x256xi32>
    %c128_i32_12 = arith.constant 128 : i32
    %27 = vector.broadcast %c128_i32_12 : i32 to vector<1x256xi32>
    %28 = arith.cmpi slt, %26, %27 : vector<1x256xi32>
    %29 = arith.andi %24, %28 : vector<1x256xi1>
    %c2_i32 = arith.constant 2 : i32
    %30 = vector.broadcast %c2_i32 : i32 to vector<1x256xi32>
    %31 = arith.addi %20, %30 : vector<1x256xi32>
    %c0_i32_13 = arith.constant 0 : i32
    %32 = vector.broadcast %c0_i32_13 : i32 to vector<1x256xi32>
    %33 = arith.cmpi sge, %31, %32 : vector<1x256xi32>
    %c2_i32_14 = arith.constant 2 : i32
    %34 = vector.broadcast %c2_i32_14 : i32 to vector<1x256xi32>
    %35 = arith.addi %20, %34 : vector<1x256xi32>
    %c128_i32_15 = arith.constant 128 : i32
    %36 = vector.broadcast %c128_i32_15 : i32 to vector<1x256xi32>
    %37 = arith.cmpi slt, %35, %36 : vector<1x256xi32>
    %38 = arith.andi %33, %37 : vector<1x256xi1>
    %c0_16 = arith.constant 0 : index
    %c0_17 = arith.constant 0 : index
    %39 = vector.load %arg5[%c0_16, %c0_17] : memref<32x1xf32, #tpu.memory_space<vmem>>, vector<32x1xf32>
    %c0_18 = arith.constant 0 : index
    %c0_19 = arith.constant 0 : index
    %40 = vector.load %arg6[%c0_18, %c0_19] : memref<32x1xf32, #tpu.memory_space<vmem>>, vector<32x1xf32>
    %cst = arith.constant dense<0.000000e+00> : vector<32x2xf32>
    %41 = tpu.matmul %0, %2, %cst {dimension_numbers = #tpu.dot_dimension_numbers<[1], [0], [0], [1], [0, 0, 1, 1], [], []>} : vector<32x256xf32>, vector<256x2xf32>, vector<32x2xf32> -> vector<32x2xf32>
    %cst_20 = arith.constant dense<0.000000e+00> : vector<32x2xf32>
    %42 = tpu.matmul %1, %41, %cst_20 {dimension_numbers = #tpu.dot_dimension_numbers<[1], [0], [0], [1], [0, 0, 1, 1], [], []>} : vector<32x32xf32>, vector<32x2xf32>, vector<32x2xf32> -> vector<32x2xf32>
    %cst_21 = arith.constant dense<0.000000e+00> : vector<32x256xf32>
    %43 = tpu.matmul %42, %3, %cst_21 {dimension_numbers = #tpu.dot_dimension_numbers<[1], [0], [0], [1], [0, 0, 1, 1], [], []>} : vector<32x2xf32>, vector<2x256xf32>, vector<32x256xf32> -> vector<32x256xf32>
    %44 = arith.subf %0, %43 : vector<32x256xf32>
    %45 = arith.mulf %44, %44 : vector<32x256xf32>
    %cst_22 = arith.constant dense<0.000000e+00> : vector<32x2xf32>
    %46 = tpu.matmul %45, %2, %cst_22 {dimension_numbers = #tpu.dot_dimension_numbers<[1], [0], [0], [1], [0, 0, 1, 1], [], []>} : vector<32x256xf32>, vector<256x2xf32>, vector<32x2xf32> -> vector<32x2xf32>
    %cst_23 = arith.constant dense<0.000000e+00> : vector<32x2xf32>
    %47 = tpu.matmul %1, %46, %cst_23 {dimension_numbers = #tpu.dot_dimension_numbers<[1], [0], [0], [1], [0, 0, 1, 1], [], []>} : vector<32x32xf32>, vector<32x2xf32>, vector<32x2xf32> -> vector<32x2xf32>
    %cst_24 = arith.constant 9.99999974E-6 : f32
    %48 = vector.broadcast %cst_24 : f32 to vector<32x2xf32>
    %49 = arith.addf %47, %48 : vector<32x2xf32>
    %50 = math.rsqrt %49 : vector<32x2xf32>
    %51 = vector.broadcast %39 : vector<32x1xf32> to vector<32x2xf32>
    %52 = arith.mulf %50, %51 : vector<32x2xf32>
    %cst_25 = arith.constant dense<0.000000e+00> : vector<32x256xf32>
    %53 = tpu.matmul %52, %3, %cst_25 {dimension_numbers = #tpu.dot_dimension_numbers<[1], [0], [0], [1], [0, 0, 1, 1], [], []>} : vector<32x2xf32>, vector<2x256xf32>, vector<32x256xf32> -> vector<32x256xf32>
    %54 = arith.mulf %44, %53 : vector<32x256xf32>
    %55 = vector.broadcast %40 : vector<32x1xf32> to vector<32x256xf32>
    %56 = arith.addf %54, %55 : vector<32x256xf32>
    %cst_26 = arith.constant 0.000000e+00 : f32
    %57 = vector.broadcast %cst_26 : f32 to vector<32x256xf32>
    %58 = arith.maximumf %56, %57 : vector<32x256xf32>
    %c2_i32_27 = arith.constant 2 : i32
    %59 = tpu.dynamic_rotate %58 by %c2_i32_27 dim 1 : vector<32x256xf32>, i32 -> vector<32x256xf32>
    %cst_28 = arith.constant 0.000000e+00 : f32
    %60 = vector.shape_cast %29 : vector<1x256xi1> to vector<1x256xi1>
    %61 = vector.broadcast %60 : vector<1x256xi1> to vector<32x256xi1>
    %62 = vector.broadcast %cst_28 : f32 to vector<32x256xf32>
    %63 = arith.select %61, %59, %62 : vector<32x256xi1>, vector<32x256xf32>
    %c254_i32 = arith.constant 254 : i32
    %64 = tpu.dynamic_rotate %58 by %c254_i32 dim 1 : vector<32x256xf32>, i32 -> vector<32x256xf32>
    %cst_29 = arith.constant 0.000000e+00 : f32
    %65 = vector.shape_cast %38 : vector<1x256xi1> to vector<1x256xi1>
    %66 = vector.broadcast %65 : vector<1x256xi1> to vector<32x256xi1>
    %67 = vector.broadcast %cst_29 : f32 to vector<32x256xf32>
    %68 = arith.select %66, %64, %67 : vector<32x256xi1>, vector<32x256xf32>
    %69 = tpu.concatenate %63, %58, %68 in 0 : vector<32x256xf32>, vector<32x256xf32>, vector<32x256xf32> -> vector<96x256xf32>
    %c0_30 = arith.constant 0 : index
    %c0_31 = arith.constant 0 : index
    %70 = vector.load %arg7[%c0_30, %c0_31] : memref<32x96xf32, #tpu.memory_space<vmem>>, vector<32x96xf32>
    %cst_32 = arith.constant dense<0.000000e+00> : vector<32x256xf32>
    %71 = tpu.matmul %70, %69, %cst_32 {dimension_numbers = #tpu.dot_dimension_numbers<[1], [0], [0], [1], [0, 0, 1, 1], [], []>} : vector<32x96xf32>, vector<96x256xf32>, vector<32x256xf32> -> vector<32x256xf32>
    %c0_33 = arith.constant 0 : index
    %c0_34 = arith.constant 0 : index
    %72 = vector.load %arg8[%c0_33, %c0_34] : memref<32x1xf32, #tpu.memory_space<vmem>>, vector<32x1xf32>
    %c0_35 = arith.constant 0 : index
    %c0_36 = arith.constant 0 : index
    %73 = vector.load %arg9[%c0_35, %c0_36] : memref<32x1xf32, #tpu.memory_space<vmem>>, vector<32x1xf32>
    %cst_37 = arith.constant dense<0.000000e+00> : vector<32x2xf32>
    %74 = tpu.matmul %71, %2, %cst_37 {dimension_numbers = #tpu.dot_dimension_numbers<[1], [0], [0], [1], [0, 0, 1, 1], [], []>} : vector<32x256xf32>, vector<256x2xf32>, vector<32x2xf32> -> vector<32x2xf32>
    %cst_38 = arith.constant dense<0.000000e+00> : vector<32x2xf32>
    %75 = tpu.matmul %1, %74, %cst_38 {dimension_numbers = #tpu.dot_dimension_numbers<[1], [0], [0], [1], [0, 0, 1, 1], [], []>} : vector<32x32xf32>, vector<32x2xf32>, vector<32x2xf32> -> vector<32x2xf32>
    %cst_39 = arith.constant dense<0.000000e+00> : vector<32x256xf32>
    %76 = tpu.matmul %75, %3, %cst_39 {dimension_numbers = #tpu.dot_dimension_numbers<[1], [0], [0], [1], [0, 0, 1, 1], [], []>} : vector<32x2xf32>, vector<2x256xf32>, vector<32x256xf32> -> vector<32x256xf32>
    %77 = arith.subf %71, %76 : vector<32x256xf32>
    %78 = arith.mulf %77, %77 : vector<32x256xf32>
    %cst_40 = arith.constant dense<0.000000e+00> : vector<32x2xf32>
    %79 = tpu.matmul %78, %2, %cst_40 {dimension_numbers = #tpu.dot_dimension_numbers<[1], [0], [0], [1], [0, 0, 1, 1], [], []>} : vector<32x256xf32>, vector<256x2xf32>, vector<32x2xf32> -> vector<32x2xf32>
    %cst_41 = arith.constant dense<0.000000e+00> : vector<32x2xf32>
    %80 = tpu.matmul %1, %79, %cst_41 {dimension_numbers = #tpu.dot_dimension_numbers<[1], [0], [0], [1], [0, 0, 1, 1], [], []>} : vector<32x32xf32>, vector<32x2xf32>, vector<32x2xf32> -> vector<32x2xf32>
    %cst_42 = arith.constant 9.99999974E-6 : f32
    %81 = vector.broadcast %cst_42 : f32 to vector<32x2xf32>
    %82 = arith.addf %80, %81 : vector<32x2xf32>
    %83 = math.rsqrt %82 : vector<32x2xf32>
    %84 = vector.broadcast %72 : vector<32x1xf32> to vector<32x2xf32>
    %85 = arith.mulf %83, %84 : vector<32x2xf32>
    %cst_43 = arith.constant dense<0.000000e+00> : vector<32x256xf32>
    %86 = tpu.matmul %85, %3, %cst_43 {dimension_numbers = #tpu.dot_dimension_numbers<[1], [0], [0], [1], [0, 0, 1, 1], [], []>} : vector<32x2xf32>, vector<2x256xf32>, vector<32x256xf32> -> vector<32x256xf32>
    %87 = arith.mulf %77, %86 : vector<32x256xf32>
    %88 = vector.broadcast %73 : vector<32x1xf32> to vector<32x256xf32>
    %89 = arith.addf %87, %88 : vector<32x256xf32>
    %cst_44 = arith.constant 0.000000e+00 : f32
    %90 = vector.broadcast %cst_44 : f32 to vector<32x256xf32>
    %91 = arith.maximumf %89, %90 : vector<32x256xf32>
    %c2_i32_45 = arith.constant 2 : i32
    %92 = tpu.dynamic_rotate %91 by %c2_i32_45 dim 1 : vector<32x256xf32>, i32 -> vector<32x256xf32>
    %cst_46 = arith.constant 0.000000e+00 : f32
    %93 = vector.shape_cast %29 : vector<1x256xi1> to vector<1x256xi1>
    %94 = vector.broadcast %93 : vector<1x256xi1> to vector<32x256xi1>
    %95 = vector.broadcast %cst_46 : f32 to vector<32x256xf32>
    %96 = arith.select %94, %92, %95 : vector<32x256xi1>, vector<32x256xf32>
    %c254_i32_47 = arith.constant 254 : i32
    %97 = tpu.dynamic_rotate %91 by %c254_i32_47 dim 1 : vector<32x256xf32>, i32 -> vector<32x256xf32>
    %cst_48 = arith.constant 0.000000e+00 : f32
    %98 = vector.shape_cast %38 : vector<1x256xi1> to vector<1x256xi1>
    %99 = vector.broadcast %98 : vector<1x256xi1> to vector<32x256xi1>
    %100 = vector.broadcast %cst_48 : f32 to vector<32x256xf32>
    %101 = arith.select %99, %97, %100 : vector<32x256xi1>, vector<32x256xf32>
    %102 = tpu.concatenate %96, %91, %101 in 0 : vector<32x256xf32>, vector<32x256xf32>, vector<32x256xf32> -> vector<96x256xf32>
    %c0_49 = arith.constant 0 : index
    %c0_50 = arith.constant 0 : index
    %103 = vector.load %arg10[%c0_49, %c0_50] : memref<32x96xf32, #tpu.memory_space<vmem>>, vector<32x96xf32>
    %cst_51 = arith.constant dense<0.000000e+00> : vector<32x256xf32>
    %104 = tpu.matmul %103, %102, %cst_51 {dimension_numbers = #tpu.dot_dimension_numbers<[1], [0], [0], [1], [0, 0, 1, 1], [], []>} : vector<32x96xf32>, vector<96x256xf32>, vector<32x256xf32> -> vector<32x256xf32>
    %105 = arith.addf %0, %104 : vector<32x256xf32>
    %c0_52 = arith.constant 0 : index
    %c0_53 = arith.constant 0 : index
    %106 = vector.load %arg11[%c0_52, %c0_53] : memref<32x256xf32, #tpu.memory_space<vmem>>, vector<32x256xf32>
    tpu.vector_store %arg11[%c0_52, %c0_53], %105 {strides = array<i32>} : memref<32x256xf32, #tpu.memory_space<vmem>>, vector<32x256xf32>,
    return
  }
  func.func @transform_0(%arg0: i32) -> (i32, i32) {
    %c0_i32 = arith.constant 0 : i32
    %c0_i32_0 = arith.constant 0 : i32
    return %c0_i32, %arg0 : i32, i32
  }
  func.func @transform_1(%arg0: i32) -> (i32, i32) {
    %c0_i32 = arith.constant 0 : i32
    %c0_i32_0 = arith.constant 0 : i32
    %c0_i32_1 = arith.constant 0 : i32
    return %c0_i32, %c0_i32_0 : i32, i32
  }
  func.func @transform_2(%arg0: i32) -> (i32, i32) {
    %c0_i32 = arith.constant 0 : i32
    %c0_i32_0 = arith.constant 0 : i32
    %c0_i32_1 = arith.constant 0 : i32
    return %c0_i32, %c0_i32_0 : i32, i32
  }
  func.func @transform_3(%arg0: i32) -> (i32, i32) {
    %c0_i32 = arith.constant 0 : i32
    %c0_i32_0 = arith.constant 0 : i32
    %c0_i32_1 = arith.constant 0 : i32
    return %c0_i32, %c0_i32_0 : i32, i32
  }
  func.func @transform_4(%arg0: i32) -> (i32, i32) {
    %c0_i32 = arith.constant 0 : i32
    %c0_i32_0 = arith.constant 0 : i32
    %c0_i32_1 = arith.constant 0 : i32
    return %c0_i32, %c0_i32_0 : i32, i32
  }
  func.func @transform_5(%arg0: i32) -> (i32, i32) {
    %c0_i32 = arith.constant 0 : i32
    %c0_i32_0 = arith.constant 0 : i32
    %c0_i32_1 = arith.constant 0 : i32
    return %c0_i32, %c0_i32_0 : i32, i32
  }
  func.func @transform_6(%arg0: i32) -> (i32, i32) {
    %c0_i32 = arith.constant 0 : i32
    %c0_i32_0 = arith.constant 0 : i32
    %c0_i32_1 = arith.constant 0 : i32
    return %c0_i32, %c0_i32_0 : i32, i32
  }
  func.func @transform_7(%arg0: i32) -> (i32, i32) {
    %c0_i32 = arith.constant 0 : i32
    %c0_i32_0 = arith.constant 0 : i32
    %c0_i32_1 = arith.constant 0 : i32
    return %c0_i32, %c0_i32_0 : i32, i32
  }
  func.func @transform_8(%arg0: i32) -> (i32, i32) {
    %c0_i32 = arith.constant 0 : i32
    %c0_i32_0 = arith.constant 0 : i32
    %c0_i32_1 = arith.constant 0 : i32
    return %c0_i32, %c0_i32_0 : i32, i32
  }
  func.func @transform_9(%arg0: i32) -> (i32, i32) {
    %c0_i32 = arith.constant 0 : i32
    %c0_i32_0 = arith.constant 0 : i32
    %c0_i32_1 = arith.constant 0 : i32
    return %c0_i32, %c0_i32_0 : i32, i32
  }
  func.func @transform_10(%arg0: i32) -> (i32, i32) {
    %c0_i32 = arith.constant 0 : i32
    %c0_i32_0 = arith.constant 0 : i32
    return %c0_i32, %arg0 : i32, i32
  }
}

</mosaic_0001>

<llo_original>
// kernel: tpu_custom_call.1
$region0: #{tpu_custom_call.1}
  #allocation0 [shape = 'u32[]', space=smem, size = 0x4, offset = 0x4, fixed_abs, tag = 'smem constant byte address 0x4 - core index']
  #allocation1 [shape = 'u32[144,128]{1,0:T(1,128)}', space=vmem, size = 0x12000, scoped, tag = 'internal scratch']
  %s0 = inlined_call_operand.vmem [shape: f32[32,512], index: 0, kind: input, shape index: {}]
  %s1 = inlined_call_operand.vmem [shape: f32[256,2], index: 1, kind: input, shape index: {}]
  %s2 = inlined_call_operand.vmem [shape: f32[2,256], index: 2, kind: input, shape index: {}]
  %s3 = inlined_call_operand.vmem [shape: f32[32,32], index: 3, kind: input, shape index: {}]
  %s4 = inlined_call_operand.vmem [shape: f32[32,1], index: 4, kind: input, shape index: {}]
  %s5 = inlined_call_operand.vmem [shape: f32[32,1], index: 5, kind: input, shape index: {}]
  %s6 = inlined_call_operand.vmem [shape: f32[32,96], index: 6, kind: input, shape index: {}]
  %s7 = inlined_call_operand.vmem [shape: f32[32,1], index: 7, kind: input, shape index: {}]
  %s8 = inlined_call_operand.vmem [shape: f32[32,1], index: 8, kind: input, shape index: {}]
  %s9 = inlined_call_operand.vmem [shape: f32[32,96], index: 9, kind: input, shape index: {}]
  %s10 = inlined_call_operand.hbm [shape: f32[32,512], index: 10, kind: output, shape index: {}]
  %s11 = sld [smem:[#allocation0]]
  $region96: #{tpu_custom_call.1} parent=0
    _
  %s13 = ssub.s32 1, %s11
  %s14 = scalar_select 0, %s13, %s11
  $region1: #{tpu_custom_call.1} parent=0
    #allocation2 [shape = 'u8[65536]{0}', space=vmem, size = 0x10000, scoped, tag = 'input window, operand 0']
    #allocation3 [shape = 'u8[65536]{0}', space=vmem, size = 0x10000, scoped, tag = 'output window, operand 0']
    #allocation4 [shape = 's32[2]{0}', space=sflag, size = 0x8, scoped, tag = 'scoped memory for tpu_custom_call.1']
    %15 = vsyncpa [#allocation4], 0
    %s16 = scalar_lea.sflag [#allocation4], 1
    %17 = vsyncpa %s16, 0
    loop: start=0, step=1, limit=4
    $region2: #{tpu_custom_call.1} parent=1 // loop_pre_header
      _
    $region3: #{tpu_custom_call.1} parent=1 // loop_header
      %s19 = sphi 0, %s23
      %p20 = scmp.ge.s32.totalorder %s19, 4
      %s29 = sphi 0, %s31
      %s32 = sphi 0, %s29
      %s33 = sphi 0, %s32
      %s49 = sphi 0, %s33
      %s53 = sphi 0, %s53
      %s55 = sphi 0, %s53
      %s56 = sphi 0, %s55
      %s70 = sphi 0, %s56
      %s74 = sphi 0, %s74
      %s76 = sphi 0, %s74
      %s77 = sphi 0, %s76
      %s91 = sphi 0, %s77
      %s95 = sphi 0, %s95
      %s97 = sphi 0, %s95
      %s98 = sphi 0, %s97
      %s112 = sphi 0, %s98
      %s116 = sphi 0, %s116
      %s118 = sphi 0, %s116
      %s119 = sphi 0, %s118
      %s133 = sphi 0, %s119
      %s137 = sphi 0, %s137
      %s139 = sphi 0, %s137
      %s140 = sphi 0, %s139
      %s154 = sphi 0, %s140
      %s158 = sphi 0, %s158
      %s160 = sphi 0, %s158
      %s161 = sphi 0, %s160
      %s175 = sphi 0, %s161
      %s179 = sphi 0, %s179
      %s181 = sphi 0, %s179
      %s182 = sphi 0, %s181
      %s196 = sphi 0, %s182
      %s200 = sphi 0, %s200
      %s202 = sphi 0, %s200
      %s203 = sphi 0, %s202
      %s217 = sphi 0, %s203
      %s221 = sphi 0, %s221
      %s223 = sphi 0, %s221
      %s224 = sphi 0, %s223
      %s238 = sphi 0, %s224
      %s244 = sphi 0, %s246
      %s247 = sphi 0, %s244
      %s248 = sphi 0, %s247
      %s264 = sphi 0, %s248
    $region4: #{tpu_custom_call.1} parent=1 // loop_header_branch
      %22 = sbr.rel (%p20) target = $region8
    $region5: #{tpu_custom_call.1} parent=1 // loop_body
      %s24 = ssub.s32 %s19, 1
      %s25 = ssub.s32 %s19, 2
      %s26 = sadd.s32 %s19, 1
      %s27 = ssub.s32 %s19, %s26
      %p28 = scmp.eq.s32.totalorder %s27, 0
      %s30 = sadd.s32 %s29, 1
      %s31 = scalar_select %p28, %s29, %s30
      %p34 = pneg %p28
      %p35 = scmp.eq.s32.totalorder %s19, 1
      %p36 = por %p34, %p35
      %p37 = scmp.ne.s32.totalorder %s29, %s32
      %p38 = scmp.eq.s32.totalorder %s19, 0
      %p39 = por %p37, %p38
      %p40 = scmp.ne.s32.totalorder %s29, %s32
      %p41 = scmp.eq.s32.totalorder %s24, 1
      %p42 = por %p40, %p41
      %p43 = scmp.ne.s32.totalorder %s32, %s33
      %p44 = scmp.eq.s32.totalorder %s24, 0
      %p45 = por %p43, %p44
      %p46 = scmp.ne.s32.totalorder %s32, %s33
      %p47 = scmp.eq.s32.totalorder %s25, 1
      %p48 = por %p46, %p47
      %p50 = scmp.ne.s32.totalorder %s33, %s49
      %p51 = scmp.eq.s32.totalorder %s25, 0
      %p52 = por %p50, %p51
      %s54 = sadd.s32 %s53, 1
      %p57 = scmp.eq.s32.totalorder %s19, 1
      %p58 = scmp.ne.s32.totalorder %s53, %s55
      %p59 = scmp.eq.s32.totalorder %s19, 0
      %p60 = por %p58, %p59
      %p61 = scmp.ne.s32.totalorder %s53, %s55
      %p62 = scmp.eq.s32.totalorder %s24, 1
      %p63 = por %p61, %p62
      %p64 = scmp.ne.s32.totalorder %s55, %s56
      %p65 = scmp.eq.s32.totalorder %s24, 0
      %p66 = por %p64, %p65
      %p67 = scmp.ne.s32.totalorder %s55, %s56
      %p68 = scmp.eq.s32.totalorder %s25, 1
      %p69 = por %p67, %p68
      %p71 = scmp.ne.s32.totalorder %s56, %s70
      %p72 = scmp.eq.s32.totalorder %s25, 0
      %p73 = por %p71, %p72
      %s75 = sadd.s32 %s74, 1
      %p78 = scmp.eq.s32.totalorder %s19, 1
      %p79 = scmp.ne.s32.totalorder %s74, %s76
      %p80 = scmp.eq.s32.totalorder %s19, 0
      %p81 = por %p79, %p80
      %p82 = scmp.ne.s32.totalorder %s74, %s76
      %p83 = scmp.eq.s32.totalorder %s24, 1
      %p84 = por %p82, %p83
      %p85 = scmp.ne.s32.totalorder %s76, %s77
      %p86 = scmp.eq.s32.totalorder %s24, 0
      %p87 = por %p85, %p86
      %p88 = scmp.ne.s32.totalorder %s76, %s77
      %p89 = scmp.eq.s32.totalorder %s25, 1
      %p90 = por %p88, %p89
      %p92 = scmp.ne.s32.totalorder %s77, %s91
      %p93 = scmp.eq.s32.totalorder %s25, 0
      %p94 = por %p92, %p93
      %s96 = sadd.s32 %s95, 1
      %p99 = scmp.eq.s32.totalorder %s19, 1
      %p100 = scmp.ne.s32.totalorder %s95, %s97
      %p101 = scmp.eq.s32.totalorder %s19, 0
      %p102 = por %p100, %p101
      %p103 = scmp.ne.s32.totalorder %s95, %s97
      %p104 = scmp.eq.s32.totalorder %s24, 1
      %p105 = por %p103, %p104
      %p106 = scmp.ne.s32.totalorder %s97, %s98
      %p107 = scmp.eq.s32.totalorder %s24, 0
      %p108 = por %p106, %p107
      %p109 = scmp.ne.s32.totalorder %s97, %s98
      %p110 = scmp.eq.s32.totalorder %s25, 1
      %p111 = por %p109, %p110
      %p113 = scmp.ne.s32.totalorder %s98, %s112
      %p114 = scmp.eq.s32.totalorder %s25, 0
      %p115 = por %p113, %p114
      %s117 = sadd.s32 %s116, 1
      %p120 = scmp.eq.s32.totalorder %s19, 1
      %p121 = scmp.ne.s32.totalorder %s116, %s118
      %p122 = scmp.eq.s32.totalorder %s19, 0
      %p123 = por %p121, %p122
      %p124 = scmp.ne.s32.totalorder %s116, %s118
      %p125 = scmp.eq.s32.totalorder %s24, 1
      %p126 = por %p124, %p125
      %p127 = scmp.ne.s32.totalorder %s118, %s119
      %p128 = scmp.eq.s32.totalorder %s24, 0
      %p129 = por %p127, %p128
      %p130 = scmp.ne.s32.totalorder %s118, %s119
      %p131 = scmp.eq.s32.totalorder %s25, 1
      %p132 = por %p130, %p131
      %p134 = scmp.ne.s32.totalorder %s119, %s133
      %p135 = scmp.eq.s32.totalorder %s25, 0
      %p136 = por %p134, %p135
      %s138 = sadd.s32 %s137, 1
      %p141 = scmp.eq.s32.totalorder %s19, 1
      %p142 = scmp.ne.s32.totalorder %s137, %s139
      %p143 = scmp.eq.s32.totalorder %s19, 0
      %p144 = por %p142, %p143
      %p145 = scmp.ne.s32.totalorder %s137, %s139
      %p146 = scmp.eq.s32.totalorder %s24, 1
      %p147 = por %p145, %p146
      %p148 = scmp.ne.s32.totalorder %s139, %s140
      %p149 = scmp.eq.s32.totalorder %s24, 0
      %p150 = por %p148, %p149
      %p151 = scmp.ne.s32.totalorder %s139, %s140
      %p152 = scmp.eq.s32.totalorder %s25, 1
      %p153 = por %p151, %p152
      %p155 = scmp.ne.s32.totalorder %s140, %s154
      %p156 = scmp.eq.s32.totalorder %s25, 0
      %p157 = por %p155, %p156
      %s159 = sadd.s32 %s158, 1
      %p162 = scmp.eq.s32.totalorder %s19, 1
      %p163 = scmp.ne.s32.totalorder %s158, %s160
      %p164 = scmp.eq.s32.totalorder %s19, 0
      %p165 = por %p163, %p164
      %p166 = scmp.ne.s32.totalorder %s158, %s160
      %p167 = scmp.eq.s32.totalorder %s24, 1
      %p168 = por %p166, %p167
      %p169 = scmp.ne.s32.totalorder %s160, %s161
      %p170 = scmp.eq.s32.totalorder %s24, 0
      %p171 = por %p169, %p170
      %p172 = scmp.ne.s32.totalorder %s160, %s161
      %p173 = scmp.eq.s32.totalorder %s25, 1
      %p174 = por %p172, %p173
      %p176 = scmp.ne.s32.totalorder %s161, %s175
      %p177 = scmp.eq.s32.totalorder %s25, 0
      %p178 = por %p176, %p177
      %s180 = sadd.s32 %s179, 1
      %p183 = scmp.eq.s32.totalorder %s19, 1
      %p184 = scmp.ne.s32.totalorder %s179, %s181
      %p185 = scmp.eq.s32.totalorder %s19, 0
      %p186 = por %p184, %p185
      %p187 = scmp.ne.s32.totalorder %s179, %s181
      %p188 = scmp.eq.s32.totalorder %s24, 1
      %p189 = por %p187, %p188
      %p190 = scmp.ne.s32.totalorder %s181, %s182
      %p191 = scmp.eq.s32.totalorder %s24, 0
      %p192 = por %p190, %p191
      %p193 = scmp.ne.s32.totalorder %s181, %s182
      %p194 = scmp.eq.s32.totalorder %s25, 1
      %p195 = por %p193, %p194
      %p197 = scmp.ne.s32.totalorder %s182, %s196
      %p198 = scmp.eq.s32.totalorder %s25, 0
      %p199 = por %p197, %p198
      %s201 = sadd.s32 %s200, 1
      %p204 = scmp.eq.s32.totalorder %s19, 1
      %p205 = scmp.ne.s32.totalorder %s200, %s202
      %p206 = scmp.eq.s32.totalorder %s19, 0
      %p207 = por %p205, %p206
      %p208 = scmp.ne.s32.totalorder %s200, %s202
      %p209 = scmp.eq.s32.totalorder %s24, 1
      %p210 = por %p208, %p209
      %p211 = scmp.ne.s32.totalorder %s202, %s203
      %p212 = scmp.eq.s32.totalorder %s24, 0
      %p213 = por %p211, %p212
      %p214 = scmp.ne.s32.totalorder %s202, %s203
      %p215 = scmp.eq.s32.totalorder %s25, 1
      %p216 = por %p214, %p215
      %p218 = scmp.ne.s32.totalorder %s203, %s217
      %p219 = scmp.eq.s32.totalorder %s25, 0
      %p220 = por %p218, %p219
      %s222 = sadd.s32 %s221, 1
      %p225 = scmp.eq.s32.totalorder %s19, 1
      %p226 = scmp.ne.s32.totalorder %s221, %s223
      %p227 = scmp.eq.s32.totalorder %s19, 0
      %p228 = por %p226, %p227
      %p229 = scmp.ne.s32.totalorder %s221, %s223
      %p230 = scmp.eq.s32.totalorder %s24, 1
      %p231 = por %p229, %p230
      %p232 = scmp.ne.s32.totalorder %s223, %s224
      %p233 = scmp.eq.s32.totalorder %s24, 0
      %p234 = por %p232, %p233
      %p235 = scmp.ne.s32.totalorder %s223, %s224
      %p236 = scmp.eq.s32.totalorder %s25, 1
      %p237 = por %p235, %p236
      %p239 = scmp.ne.s32.totalorder %s224, %s238
      %p240 = scmp.eq.s32.totalorder %s25, 0
      %p241 = por %p239, %p240
      %s242 = ssub.s32 %s19, %s26
      %p243 = scmp.eq.s32.totalorder %s242, 0
      %s245 = sadd.s32 %s244, 1
      %s246 = scalar_select %p243, %s244, %s245
      %p249 = pneg %p243
      %p250 = scmp.eq.s32.totalorder %s19, 1
      %p251 = por %p249, %p250
      %p252 = scmp.ne.s32.totalorder %s244, %s247
      %p253 = scmp.eq.s32.totalorder %s19, 0
      %p254 = por %p252, %p253
      %p255 = scmp.ne.s32.totalorder %s244, %s247
      %p256 = scmp.eq.s32.totalorder %s24, 1
      %p257 = por %p255, %p256
      %p258 = scmp.ne.s32.totalorder %s247, %s248
      %p259 = scmp.eq.s32.totalorder %s24, 0
      %p260 = por %p258, %p259
      %p261 = scmp.ne.s32.totalorder %s247, %s248
      %p262 = scmp.eq.s32.totalorder %s25, 1
      %p263 = por %p261, %p262
      %p265 = scmp.ne.s32.totalorder %s248, %s264
      %p266 = scmp.eq.s32.totalorder %s25, 0
      %p267 = por %p265, %p266
      %p268 = scmp.le.s32.totalorder 1, %s19
      %p269 = scmp.lt.s32.totalorder %s19, 3
      %p270 = pnand %p268, %p269
      %p271 = pneg %p270
      // Predicated region
      $region9: #{tpu_custom_call.1} parent=5 // pred_check
        _
      $region10: #{tpu_custom_call.1} parent=5 // pred_check_branch
        %273 = sbr.rel (%p270) target = $region12
      $region11: #{tpu_custom_call.1} parent=5 // pred_region
        %s274 = ssub.s32 %s19, 1
        // Predicated region
        $region13: #{tpu_custom_call.1} parent=11 // pred_check
          %p275 = pneg %p66
        $region14: #{tpu_custom_call.1} parent=11 // pred_check_branch
          %277 = sbr.rel (%p275) target = $region16
        $region15: #{tpu_custom_call.1} parent=11 // pred_region
          _
        $region16: #{tpu_custom_call.1} parent=11 // pred_fallthru
          _
        // Predicated region
        $region17: #{tpu_custom_call.1} parent=11 // pred_check
          %p278 = pneg %p87
        $region18: #{tpu_custom_call.1} parent=11 // pred_check_branch
          %280 = sbr.rel (%p278) target = $region20
        $region19: #{tpu_custom_call.1} parent=11 // pred_region
          _
        $region20: #{tpu_custom_call.1} parent=11 // pred_fallthru
          _
        // Predicated region
        $region21: #{tpu_custom_call.1} parent=11 // pred_check
          %p281 = pneg %p108
        $region22: #{tpu_custom_call.1} parent=11 // pred_check_branch
          %283 = sbr.rel (%p281) target = $region24
        $region23: #{tpu_custom_call.1} parent=11 // pred_region
          _
        $region24: #{tpu_custom_call.1} parent=11 // pred_fallthru
          _
        // Predicated region
        $region25: #{tpu_custom_call.1} parent=11 // pred_check
          %p284 = pneg %p129
        $region26: #{tpu_custom_call.1} parent=11 // pred_check_branch
          %286 = sbr.rel (%p284) target = $region28
        $region27: #{tpu_custom_call.1} parent=11 // pred_region
          _
        $region28: #{tpu_custom_call.1} parent=11 // pred_fallthru
          _
        // Predicated region
        $region29: #{tpu_custom_call.1} parent=11 // pred_check
          %p287 = pneg %p150
        $region30: #{tpu_custom_call.1} parent=11 // pred_check_branch
          %289 = sbr.rel (%p287) target = $region32
        $region31: #{tpu_custom_call.1} parent=11 // pred_region
          _
        $region32: #{tpu_custom_call.1} parent=11 // pred_fallthru
          _
        // Predicated region
        $region33: #{tpu_custom_call.1} parent=11 // pred_check
          %p290 = pneg %p171
        $region34: #{tpu_custom_call.1} parent=11 // pred_check_branch
          %292 = sbr.rel (%p290) target = $region36
        $region35: #{tpu_custom_call.1} parent=11 // pred_region
          _
        $region36: #{tpu_custom_call.1} parent=11 // pred_fallthru
          _
        // Predicated region
        $region37: #{tpu_custom_call.1} parent=11 // pred_check
          %p293 = pneg %p192
        $region38: #{tpu_custom_call.1} parent=11 // pred_check_branch
          %295 = sbr.rel (%p293) target = $region40
        $region39: #{tpu_custom_call.1} parent=11 // pred_region
          _
        $region40: #{tpu_custom_call.1} parent=11 // pred_fallthru
          _
        // Predicated region
        $region41: #{tpu_custom_call.1} parent=11 // pred_check
          %p296 = pneg %p213
        $region42: #{tpu_custom_call.1} parent=11 // pred_check_branch
          %298 = sbr.rel (%p296) target = $region44
        $region43: #{tpu_custom_call.1} parent=11 // pred_region
          _
        $region44: #{tpu_custom_call.1} parent=11 // pred_fallthru
          _
        // Predicated region
        $region45: #{tpu_custom_call.1} parent=11 // pred_check
          %p299 = pneg %p234
        $region46: #{tpu_custom_call.1} parent=11 // pred_check_branch
          %301 = sbr.rel (%p299) target = $region48
        $region47: #{tpu_custom_call.1} parent=11 // pred_region
          _
        $region48: #{tpu_custom_call.1} parent=11 // pred_fallthru
          _
      $region12: #{tpu_custom_call.1} parent=5 // pred_fallthru
        _
      %p302 = scmp.lt.s32.totalorder %s19, 2
      // Predicated region
      $region49: #{tpu_custom_call.1} parent=5 // pred_check
        %p303 = pneg %p302
      $region50: #{tpu_custom_call.1} parent=5 // pred_check_branch
        %305 = sbr.rel (%p303) target = $region52
      $region51: #{tpu_custom_call.1} parent=5 // pred_region
        // Predicated region
        $region53: #{tpu_custom_call.1} parent=51 // pred_check
          %p306 = pneg %p39
        $region54: #{tpu_custom_call.1} parent=51 // pred_check_branch
          %308 = sbr.rel (%p306) target = $region56
        $region55: #{tpu_custom_call.1} parent=51 // pred_region
          %s309 = sand.u32 %s29, 1
          %s310 = sand.u32 %s29, 1
          %s311 = smul.addr %s310, 64
          %s312 = scalar_lea.vmem [#allocation2], %s311
          %s313 = smul.u32 2, %s19
          %s314 = smul.addr %s313, 8
          %s315 = scalar_lea.vmem %s0, %s314
          // Predicated region
          $region57: #{tpu_custom_call.1} parent=55 // pred_check
            _
          $region58: #{tpu_custom_call.1} parent=55 // pred_check_branch
            %317 = sbr.rel (0) target = $region60
          $region59: #{tpu_custom_call.1} parent=55 // pred_region
            // Predicated region
            $region61: #{tpu_custom_call.1} parent=59 // pred_check
              _
            $region62: #{tpu_custom_call.1} parent=59 // pred_check_branch
              %319 = sbr.rel (0) target = $region64
            $region63: #{tpu_custom_call.1} parent=59 // pred_region
              loop: start=0, step=1, limit=1
              $region65: #{tpu_custom_call.1} parent=63 // loop_pre_header
                _
              $region66: #{tpu_custom_call.1} parent=63 // loop_header
                %s321 = sphi 0, %s325
                %p322 = scmp.ge.s32.totalorder %s321, 1
                %s326 = sphi %s315, %s315
                %s327 = sphi %s312, %s312
              $region67: #{tpu_custom_call.1} parent=63 // loop_header_branch
                %324 = sbr.rel (%p322) target = $region71
              $region68: #{tpu_custom_call.1} parent=63 // loop_body
                %v328 = vld [vmem:[%s326] sm:$0xff]
                %329 = vst [vmem:[%s327] sm:$0xff] %v328
                %v330 = vld [vmem:[%s326 + $0x8] sm:$0xff]
                %331 = vst [vmem:[%s327 + $0x8] sm:$0xff] %v330
                %v332 = vld [vmem:[%s326 + $0x20] sm:$0xff]
                %333 = vst [vmem:[%s327 + $0x10] sm:$0xff] %v332
                %v334 = vld [vmem:[%s326 + $0x28] sm:$0xff]
                %335 = vst [vmem:[%s327 + $0x18] sm:$0xff] %v334
                %v336 = vld [vmem:[%s326 + $0x40] sm:$0xff]
                %337 = vst [vmem:[%s327 + $0x20] sm:$0xff] %v336
                %v338 = vld [vmem:[%s326 + $0x48] sm:$0xff]
                %339 = vst [vmem:[%s327 + $0x28] sm:$0xff] %v338
                %v340 = vld [vmem:[%s326 + $0x60] sm:$0xff]
                %341 = vst [vmem:[%s327 + $0x30] sm:$0xff] %v340
                %v342 = vld [vmem:[%s326 + $0x68] sm:$0xff]
                %343 = vst [vmem:[%s327 + $0x38] sm:$0xff] %v342
              $region69: #{tpu_custom_call.1} parent=63 // loop_footer
                %s325 = sadd.s32 1, %s321
              $region70: #{tpu_custom_call.1} parent=63 // loop_footer_branch
                %320 = sbr.rel target = $region66
              $region71: #{tpu_custom_call.1} parent=63 // loop_exit
                _
            $region64: #{tpu_custom_call.1} parent=59 // pred_fallthru
              _
            // Predicated region
            $region72: #{tpu_custom_call.1} parent=59 // pred_check
              _
            $region73: #{tpu_custom_call.1} parent=59 // pred_check_branch
              %345 = sbr.rel target = $region75
            $region74: #{tpu_custom_call.1} parent=59 // pred_region
              _
            $region75: #{tpu_custom_call.1} parent=59 // pred_fallthru
              _
          $region60: #{tpu_custom_call.1} parent=55 // pred_fallthru
            _
          %346 = vnop
        $region56: #{tpu_custom_call.1} parent=51 // pred_fallthru
          _
      $region52: #{tpu_custom_call.1} parent=5 // pred_fallthru
        _
      %p347 = scmp.le.s32.totalorder 1, %s19
      %p348 = scmp.lt.s32.totalorder %s19, 3
      %p349 = pnand %p347, %p348
      %p350 = pneg %p349
      // Predicated region
      $region76: #{tpu_custom_call.1} parent=5 // pred_check
        _
      $region77: #{tpu_custom_call.1} parent=5 // pred_check_branch
        %352 = sbr.rel (%p349) target = $region79
      $region78: #{tpu_custom_call.1} parent=5 // pred_region
        %s353 = ssub.s32 %s19, 1
        %s354 = sand.u32 %s32, 1
        %s355 = sand.u32 %s32, 1
        %s356 = smul.addr %s355, 64
        %s357 = scalar_lea.vmem [#allocation2], %s356
        // Predicated region
        $region80: #{tpu_custom_call.1} parent=78 // pred_check
          %p358 = pneg %p45
        $region81: #{tpu_custom_call.1} parent=78 // pred_check_branch
          %360 = sbr.rel (%p358) target = $region83
        $region82: #{tpu_custom_call.1} parent=78 // pred_region
          _
        $region83: #{tpu_custom_call.1} parent=78 // pred_fallthru
          _
        %s361 = sand.u32 %s32, 1
        %s362 = sand.u32 %s32, 1
        %s363 = smul.addr %s362, 64
        %s364 = scalar_lea.vmem [#allocation2], %s363
        %p365 = pneg %p45
        %p366 = pneg %p42
        %p367 = pneg %p66
        %p368 = pneg %p63
        %p369 = pneg %p87
        %p370 = pneg %p84
        %p371 = pneg %p108
        %p372 = pneg %p105
        %p373 = pneg %p129
        %p374 = pneg %p126
        %p375 = pneg %p150
        %p376 = pneg %p147
        %p377 = pneg %p171
        %p378 = pneg %p168
        %p379 = pneg %p192
        %p380 = pneg %p189
        %p381 = pneg %p213
        %p382 = pneg %p210
        %p383 = pneg %p234
        %p384 = pneg %p231
        %p385 = pneg %p260
        %p386 = pneg %p257
        %s387 = sand.u32 %s247, 1
        %s388 = scalar_lea.sflag [#allocation4], %s387
        %s389 = sand.u32 %s247, 1
        %s390 = smul.addr %s389, 64
        %s391 = scalar_lea.vmem [#allocation3], %s390
        %s392 = smul.u32 2, %s24
        %s393 = smul.u32 2, %s24
        %v394 = vld [vmem:[%s357] sm:$0xff]
        %v395 = vld [vmem:[%s357 + $0x8] sm:$0xff]
        %v396 = vld [vmem:[%s357 + $0x10] sm:$0xff]
        %v397 = vld [vmem:[%s357 + $0x18] sm:$0xff]
        %v398 = vld [vmem:[%s357 + $0x20] sm:$0xff]
        %v399 = vld [vmem:[%s357 + $0x28] sm:$0xff]
        %v400 = vld [vmem:[%s357 + $0x30] sm:$0xff]
        %v401 = vld [vmem:[%s357 + $0x38] sm:$0xff]
        %v402 = vld [vmem:[%s3] sm:$0xff]
        %v403 = vld [vmem:[%s3 + $0x8] sm:$0xff]
        %v404 = vld [vmem:[%s3 + $0x10] sm:$0xff]
        %v405 = vld [vmem:[%s3 + $0x18] sm:$0xff]
        %v406 = vld [vmem:[%s1] sm:$0xff]
        %v407 = vld [vmem:[%s1 + $0x8] sm:$0xff]
        %v408 = vld [vmem:[%s1 + $0x10] sm:$0xff]
        %v409 = vld [vmem:[%s1 + $0x18] sm:$0xff]
        %v410 = vld [vmem:[%s1 + $0x20] sm:$0xff]
        %v411 = vld [vmem:[%s1 + $0x28] sm:$0xff]
        %v412 = vld [vmem:[%s1 + $0x30] sm:$0xff]
        %v413 = vld [vmem:[%s1 + $0x38] sm:$0xff]
        %v414 = vld [vmem:[%s1 + $0x40] sm:$0xff]
        %v415 = vld [vmem:[%s1 + $0x48] sm:$0xff]
        %v416 = vld [vmem:[%s1 + $0x50] sm:$0xff]
        %v417 = vld [vmem:[%s1 + $0x58] sm:$0xff]
        %v418 = vld [vmem:[%s1 + $0x60] sm:$0xff]
        %v419 = vld [vmem:[%s1 + $0x68] sm:$0xff]
        %v420 = vld [vmem:[%s1 + $0x70] sm:$0xff]
        %v421 = vld [vmem:[%s1 + $0x78] sm:$0xff]
        %v422 = vld [vmem:[%s1 + $0x80] sm:$0xff]
        %v423 = vld [vmem:[%s1 + $0x88] sm:$0xff]
        %v424 = vld [vmem:[%s1 + $0x90] sm:$0xff]
        %v425 = vld [vmem:[%s1 + $0x98] sm:$0xff]
        %v426 = vld [vmem:[%s1 + $0xa0] sm:$0xff]
        %v427 = vld [vmem:[%s1 + $0xa8] sm:$0xff]
        %v428 = vld [vmem:[%s1 + $0xb0] sm:$0xff]
        %v429 = vld [vmem:[%s1 + $0xb8] sm:$0xff]
        %v430 = vld [vmem:[%s1 + $0xc0] sm:$0xff]
        %v431 = vld [vmem:[%s1 + $0xc8] sm:$0xff]
        %v432 = vld [vmem:[%s1 + $0xd0] sm:$0xff]
        %v433 = vld [vmem:[%s1 + $0xd8] sm:$0xff]
        %v434 = vld [vmem:[%s1 + $0xe0] sm:$0xff]
        %v435 = vld [vmem:[%s1 + $0xe8] sm:$0xff]
        %v436 = vld [vmem:[%s1 + $0xf0] sm:$0xff]
        %v437 = vld [vmem:[%s1 + $0xf8] sm:$0xff]
        %v438 = vld [vmem:[%s2] sm:$0xf]
        %v439 = vlaneseq
        %v440 = vand.u32 %v439, 127
        %v441 = vadd.s32 %v440, 128
        %vm442 = vcmp.lt.s32.totalorder %v440, 0
        %v443 = vsub.s32 0, %v440
        %v444 = vsel %vm442, %v443, %v440
        %v445 = vshrl.u32 %v444, 7
        %v446 = vand.u32 %v444, 127
        %v447 = vsub.s32 0, %v446
        %v448 = vsel %vm442, %v447, %v446
        %vm449 = vcmp.lt.s32.totalorder %v441, 0
        %v450 = vsub.s32 0, %v441
        %v451 = vsel %vm449, %v450, %v441
        %v452 = vshrl.u32 %v451, 7
        %v453 = vand.u32 %v451, 127
        %v454 = vsub.s32 0, %v453
        %v455 = vsel %vm449, %v454, %v453
        %vm456 = vcmp.ne.s32.totalorder %v448, 0
        %vm457 = vcmp.ne.s32.totalorder %v455, 0
        %vm458 = vcmp.lt.s32.totalorder %v448, 0
        %vm459 = vcmp.lt.s32.totalorder %v455, 0
        %vm460 = vmand %vm458, %vm456
        %vm461 = vmand %vm459, %vm457
        %v462 = vadd.s32 %v448, 128
        %v463 = vadd.s32 %v455, 128
        %v464 = vsel %vm460, %v462, %v448
        %v465 = vsel %vm461, %v463, %v455
        %v466 = vadd.s32 %v464, 4294967294
        %v467 = vadd.s32 %v465, 4294967294
        %vm468 = vcmp.ge.s32.totalorder %v466, 0
        %vm469 = vcmp.ge.s32.totalorder %v467, 0
        %vm470 = vcmp.lt.s32.totalorder %v466, 128
        %vm471 = vcmp.lt.s32.totalorder %v467, 128
        %vm472 = vmand %vm468, %vm470
        %vm473 = vmand %vm469, %vm471
        %v474 = vadd.s32 %v464, 2
        %v475 = vadd.s32 %v465, 2
        %vm476 = vcmp.ge.s32.totalorder %v474, 0
        %vm477 = vcmp.ge.s32.totalorder %v475, 0
        %vm478 = vcmp.lt.s32.totalorder %v474, 128
        %vm479 = vcmp.lt.s32.totalorder %v475, 128
        %vm480 = vmand %vm476, %vm478
        %vm481 = vmand %vm477, %vm479
        %v482 = vld [vmem:[%s4] sm:$0xff]
        %v483 = vld [vmem:[%s4 + $0x8] sm:$0xff]
        %v484 = vld [vmem:[%s4 + $0x10] sm:$0xff]
        %v485 = vld [vmem:[%s4 + $0x18] sm:$0xff]
        %v486 = vld [vmem:[%s5] sm:$0xff]
        %v487 = vld [vmem:[%s5 + $0x8] sm:$0xff]
        %v488 = vld [vmem:[%s5 + $0x10] sm:$0xff]
        %v489 = vld [vmem:[%s5 + $0x18] sm:$0xff]
        %490 = vmatprep.subr.mxu0 0.0
        %491 = vmatpush1.msra.mxu0 %v406
        %492 = vmatprep.subr.mxu0 0.0
        %493 = vmatpush1.msra.mxu0 %v407
        %494 = vmatprep.subr.mxu0 0.0
        %495 = vmatpush1.msra.mxu0 %v408
        %496 = vmatprep.subr.mxu0 0.0
        %497 = vmatpush1.msra.mxu0 %v409
        %498 = vmatprep.subr.mxu0 0.0
        %499 = vmatpush1.msra.mxu0 %v410
        %500 = vmatprep.subr.mxu0 0.0
        %501 = vmatpush1.msra.mxu0 %v411
        %502 = vmatprep.subr.mxu0 0.0
        %503 = vmatpush1.msra.mxu0 %v412
        %504 = vmatprep.subr.mxu0 0.0
        %505 = vmatpush1.msra.mxu0 %v413
        %506 = vmatprep.subr.mxu0 0.0
        %507 = vmatpush1.msra.mxu0 %v414
        %508 = vmatprep.subr.mxu0 0.0
        %509 = vmatpush1.msra.mxu0 %v415
        %510 = vmatprep.subr.mxu0 0.0
        %511 = vmatpush1.msra.mxu0 %v416
        %512 = vmatprep.subr.mxu0 0.0
        %513 = vmatpush1.msra.mxu0 %v417
        %514 = vmatprep.subr.mxu0 0.0
        %515 = vmatpush1.msra.mxu0 %v418
        %516 = vmatprep.subr.mxu0 0.0
        %517 = vmatpush1.msra.mxu0 %v419
        %518 = vmatprep.subr.mxu0 0.0
        %519 = vmatpush1.msra.mxu0 %v420
        %520 = vmatprep.subr.mxu0 0.0
        %521 = vmatpush1.msra.mxu0 %v421
        %522 = vmatprep.subr.mxu0 0.0
        %523 = vmatpush1.msra.mxu0 %v422
        %524 = vmatprep.subr.mxu0 0.0
        %525 = vmatpush1.msra.mxu0 %v423
        %526 = vmatprep.subr.mxu0 0.0
        %527 = vmatpush1.msra.mxu0 %v424
        %528 = vmatprep.subr.mxu0 0.0
        %529 = vmatpush1.msra.mxu0 %v425
        %530 = vmatprep.subr.mxu0 0.0
        %531 = vmatpush1.msra.mxu0 %v426
        %532 = vmatprep.subr.mxu0 0.0
        %533 = vmatpush1.msra.mxu0 %v427
        %534 = vmatprep.subr.mxu0 0.0
        %535 = vmatpush1.msra.mxu0 %v428
        %536 = vmatprep.subr.mxu0 0.0
        %537 = vmatpush1.msra.mxu0 %v429
        %538 = vmatprep.subr.mxu0 0.0
        %539 = vmatpush1.msra.mxu0 %v430
        %540 = vmatprep.subr.mxu0 0.0
        %541 = vmatpush1.msra.mxu0 %v431
        %542 = vmatprep.subr.mxu0 0.0
        %543 = vmatpush1.msra.mxu0 %v432
        %544 = vmatprep.subr.mxu0 0.0
        %545 = vmatpush1.msra.mxu0 %v433
        %546 = vmatprep.subr.mxu0 0.0
        %547 = vmatpush1.msra.mxu0 %v434
        %548 = vmatprep.subr.mxu0 0.0
        %549 = vmatpush1.msra.mxu0 %v435
        %550 = vmatprep.subr.mxu0 0.0
        %551 = vmatpush1.msra.mxu0 %v436
        %552 = vmatprep.subr.mxu0 0.0
        %553 = vmatpush1.msra.mxu0 %v437
        %554 = vmatprep.mubr.f32.mxu0 %v395
        %555 = vmatmul.mubr.f32.gmra.mrb[0].mxu0 %v394
        %v556 = vpop.f32.mrb[0].mxu0
        %v557 = vadd.f32 0.0, %v556
        %v558 = vpop.f32.mrb[0].mxu0
        %559 = vmatprep.mubr.f32.mxu0 %v397
        %560 = vmatmul.mubr.f32.gmra.mrb[0].mxu0 %v396
        %v561 = vpop.f32.mrb[0].mxu0
        %v562 = vadd.f32 0.0, %v561
        %v563 = vpop.f32.mrb[0].mxu0
        %564 = vmatprep.mubr.f32.mxu0 %v399
        %565 = vmatmul.mubr.f32.gmra.mrb[0].mxu0 %v398
        %v566 = vpop.f32.mrb[0].mxu0
        %v567 = vadd.f32 0.0, %v566
        %v568 = vpop.f32.mrb[0].mxu0
        %569 = vmatprep.mubr.f32.mxu0 %v401
        %570 = vmatmul.mubr.f32.gmra.mrb[0].mxu0 %v400
        %v571 = vpop.f32.mrb[0].mxu0
        %v572 = vadd.f32 0.0, %v571
        %v573 = vpop.f32.mrb[0].mxu0
        %574 = vdwg.mxu0
        %vm575 = vcmask 261120
        %v577 = vsel %vm575, %v402, 0
        %v580 = vsel %vm575, %v403, 0
        %v583 = vsel %vm575, %v404, 0
        %v586 = vsel %vm575, %v405, 0
        %588 = vmatprep.subr.mxu0 0.0
        %589 = vmatpush1.msra.mxu0 %v557
        %590 = vmatprep.subr.mxu0 0.0
        %591 = vmatpush1.msra.mxu0 %v562
        %592 = vmatprep.subr.mxu0 0.0
        %593 = vmatpush1.msra.mxu0 %v567
        %594 = vmatprep.subr.mxu0 0.0
        %595 = vmatpush1.msra.mxu0 %v572
        %596 = vmatprep.subr.mxu0 0.0
        %597 = vmatpush1.msra.mxu0 0.0
        %598 = vmatprep.subr.mxu0 0.0
        %599 = vmatpush1.msra.mxu0 0.0
        %600 = vmatprep.subr.mxu0 0.0
        %601 = vmatpush1.msra.mxu0 0.0
        %602 = vmatprep.subr.mxu0 0.0
        %603 = vmatpush1.msra.mxu0 0.0
        %604 = vmatprep.subr.mxu0 0.0
        %605 = vmatpush1.msra.mxu0 0.0
        %606 = vmatprep.subr.mxu0 0.0
        %607 = vmatpush1.msra.mxu0 0.0
        %608 = vmatprep.subr.mxu0 0.0
        %609 = vmatpush1.msra.mxu0 0.0
        %610 = vmatprep.subr.mxu0 0.0
        %611 = vmatpush1.msra.mxu0 0.0
        %612 = vmatprep.subr.mxu0 0.0
        %613 = vmatpush1.msra.mxu0 0.0
        %614 = vmatprep.subr.mxu0 0.0
        %615 = vmatpush1.msra.mxu0 0.0
        %616 = vmatprep.subr.mxu0 0.0
        %617 = vmatpush1.msra.mxu0 0.0
        %618 = vmatprep.subr.mxu0 0.0
        %619 = vmatpush1.msra.mxu0 0.0
        %620 = vmatprep.subr.mxu0 0.0
        %621 = vmatpush1.msra.mxu0 0.0
        %622 = vmatprep.subr.mxu0 0.0
        %623 = vmatpush1.msra.mxu0 0.0
        %624 = vmatprep.subr.mxu0 0.0
        %625 = vmatpush1.msra.mxu0 0.0
        %626 = vmatprep.subr.mxu0 0.0
        %627 = vmatpush1.msra.mxu0 0.0
        %628 = vmatprep.subr.mxu0 0.0
        %629 = vmatpush1.msra.mxu0 0.0
        %630 = vmatprep.subr.mxu0 0.0
        %631 = vmatpush1.msra.mxu0 0.0
        %632 = vmatprep.subr.mxu0 0.0
        %633 = vmatpush1.msra.mxu0 0.0
        %634 = vmatprep.subr.mxu0 0.0
        %635 = vmatpush1.msra.mxu0 0.0
        %636 = vmatprep.subr.mxu0 0.0
        %637 = vmatpush1.msra.mxu0 0.0
        %638 = vmatprep.subr.mxu0 0.0
        %639 = vmatpush1.msra.mxu0 0.0
        %640 = vmatprep.subr.mxu0 0.0
        %641 = vmatpush1.msra.mxu0 0.0
        %642 = vmatprep.subr.mxu0 0.0
        %643 = vmatpush1.msra.mxu0 0.0
        %644 = vmatprep.subr.mxu0 0.0
        %645 = vmatpush1.msra.mxu0 0.0
        %646 = vmatprep.subr.mxu0 0.0
        %647 = vmatpush1.msra.mxu0 0.0
        %648 = vmatprep.subr.mxu0 0.0
        %649 = vmatpush1.msra.mxu0 0.0
        %650 = vmatprep.subr.mxu0 0.0
        %651 = vmatpush1.msra.mxu0 0.0
        %652 = vmatprep.mubr.f32.mxu0 0.0
        %653 = vmatmul.mubr.f32.gmra.mrb[0].mxu0 %v577
        %v654 = vpop.f32.mrb[0].mxu0
        %v655 = vadd.f32 0.0, %v654
        %v656 = vpop.f32.mrb[0].mxu0
        %657 = vmatprep.mubr.f32.mxu0 0.0
        %658 = vmatmul.mubr.f32.gmra.mrb[0].mxu0 %v580
        %v659 = vpop.f32.mrb[0].mxu0
        %v660 = vadd.f32 0.0, %v659
        %v661 = vpop.f32.mrb[0].mxu0
        %662 = vmatprep.mubr.f32.mxu0 0.0
        %663 = vmatmul.mubr.f32.gmra.mrb[0].mxu0 %v583
        %v664 = vpop.f32.mrb[0].mxu0
        %v665 = vadd.f32 0.0, %v664
        %v666 = vpop.f32.mrb[0].mxu0
        %667 = vmatprep.mubr.f32.mxu0 0.0
        %668 = vmatmul.mubr.f32.gmra.mrb[0].mxu0 %v586
        %v669 = vpop.f32.mrb[0].mxu0
        %v670 = vadd.f32 0.0, %v669
        %v671 = vpop.f32.mrb[0].mxu0
        %672 = vdwg.mxu0
        %v675 = vunpack.c.l.s4 1983009808
        %v676 = vunpack.c.0.s8 %v675
        %v677 = vlaneseq
        %v678 = vshrl.u32 %v677, 7
        %v679 = vsub.s32 %v676, %v678
        %v680 = vrot.slane %v438, %v679
        %v681 = vcombine.high %v680, %v680
        %vm682 = vcmask 15360
        %v684 = vsel %vm682, %v655, 0
        %v687 = vsel %vm682, %v660, 0
        %v690 = vsel %vm682, %v665, 0
        %v693 = vsel %vm682, %v670, 0
        %vm695 = vcmask 1041408
        %v696 = vsel %vm695, %v680, 0
        %v698 = vsel %vm695, %v681, 0
        %700 = vmatprep.subr.mxu0 %v698
        %701 = vmatpush1.msra.mxu0 %v696
        %702 = vmatprep.subr.mxu0 0.0
        %703 = vmatpush1.msra.mxu0 0.0
        %704 = vmatprep.subr.mxu0 0.0
        %705 = vmatpush1.msra.mxu0 0.0
        %706 = vmatprep.subr.mxu0 0.0
        %707 = vmatpush1.msra.mxu0 0.0
        %708 = vmatprep.subr.mxu0 0.0
        %709 = vmatpush1.msra.mxu0 0.0
        %710 = vmatprep.subr.mxu0 0.0
        %711 = vmatpush1.msra.mxu0 0.0
        %712 = vmatprep.subr.mxu0 0.0
        %713 = vmatpush1.msra.mxu0 0.0
        %714 = vmatprep.subr.mxu0 0.0
        %715 = vmatpush1.msra.mxu0 0.0
        %716 = vmatprep.subr.mxu0 0.0
        %717 = vmatpush1.msra.mxu0 0.0
        %718 = vmatprep.subr.mxu0 0.0
        %719 = vmatpush1.msra.mxu0 0.0
        %720 = vmatprep.subr.mxu0 0.0
        %721 = vmatpush1.msra.mxu0 0.0
        %722 = vmatprep.subr.mxu0 0.0
        %723 = vmatpush1.msra.mxu0 0.0
        %724 = vmatprep.subr.mxu0 0.0
        %725 = vmatpush1.msra.mxu0 0.0
        %726 = vmatprep.subr.mxu0 0.0
        %727 = vmatpush1.msra.mxu0 0.0
        %728 = vmatprep.subr.mxu0 0.0
        %729 = vmatpush1.msra.mxu0 0.0
        %730 = vmatprep.subr.mxu0 0.0
        %731 = vmatpush1.msra.mxu0 0.0
        %732 = vmatprep.subr.mxu0 0.0
        %733 = vmatpush1.msra.mxu0 0.0
        %734 = vmatprep.subr.mxu0 0.0
        %735 = vmatpush1.msra.mxu0 0.0
        %736 = vmatprep.subr.mxu0 0.0
        %737 = vmatpush1.msra.mxu0 0.0
        %738 = vmatprep.subr.mxu0 0.0
        %739 = vmatpush1.msra.mxu0 0.0
        %740 = vmatprep.subr.mxu0 0.0
        %741 = vmatpush1.msra.mxu0 0.0
        %742 = vmatprep.subr.mxu0 0.0
        %743 = vmatpush1.msra.mxu0 0.0
        %744 = vmatprep.subr.mxu0 0.0
        %745 = vmatpush1.msra.mxu0 0.0
        %746 = vmatprep.subr.mxu0 0.0
        %747 = vmatpush1.msra.mxu0 0.0
        %748 = vmatprep.subr.mxu0 0.0
        %749 = vmatpush1.msra.mxu0 0.0
        %750 = vmatprep.subr.mxu0 0.0
        %751 = vmatpush1.msra.mxu0 0.0
        %752 = vmatprep.subr.mxu0 0.0
        %753 = vmatpush1.msra.mxu0 0.0
        %754 = vmatprep.subr.mxu0 0.0
        %755 = vmatpush1.msra.mxu0 0.0
        %756 = vmatprep.subr.mxu0 0.0
        %757 = vmatpush1.msra.mxu0 0.0
        %758 = vmatprep.subr.mxu0 0.0
        %759 = vmatpush1.msra.mxu0 0.0
        %760 = vmatprep.subr.mxu0 0.0
        %761 = vmatpush1.msra.mxu0 0.0
        %762 = vmatprep.subr.mxu0 0.0
        %763 = vmatpush1.msra.mxu0 0.0
        %764 = vmatprep.mubr.f32.mxu0 0.0
        %765 = vmatmul.mubr.f32.gmra.mrb[0].mxu0 %v684
        %v766 = vpop.f32.mrb[0].mxu0
        %v767 = vadd.f32 0.0, %v766
        %v768 = vpop.f32.mrb[0].mxu0
        %v769 = vadd.f32 0.0, %v768
        %770 = vmatprep.mubr.f32.mxu0 0.0
        %771 = vmatmul.mubr.f32.gmra.mrb[0].mxu0 %v687
        %v772 = vpop.f32.mrb[0].mxu0
        %v773 = vadd.f32 0.0, %v772
        %v774 = vpop.f32.mrb[0].mxu0
        %v775 = vadd.f32 0.0, %v774
        %776 = vmatprep.mubr.f32.mxu0 0.0
        %777 = vmatmul.mubr.f32.gmra.mrb[0].mxu0 %v690
        %v778 = vpop.f32.mrb[0].mxu0
        %v779 = vadd.f32 0.0, %v778
        %v780 = vpop.f32.mrb[0].mxu0
        %v781 = vadd.f32 0.0, %v780
        %782 = vmatprep.mubr.f32.mxu0 0.0
        %783 = vmatmul.mubr.f32.gmra.mrb[0].mxu0 %v693
        %v784 = vpop.f32.mrb[0].mxu0
        %v785 = vadd.f32 0.0, %v784
        %v786 = vpop.f32.mrb[0].mxu0
        %v787 = vadd.f32 0.0, %v786
        %788 = vdwg.mxu0
        %v789 = vsub.f32 %v394, %v767
        %v790 = vsub.f32 %v395, %v769
        %v791 = vsub.f32 %v396, %v773
        %v792 = vsub.f32 %v397, %v775
        %v793 = vsub.f32 %v398, %v779
        %v794 = vsub.f32 %v399, %v781
        %v795 = vsub.f32 %v400, %v785
        %v796 = vsub.f32 %v401, %v787
        %v797 = vmul.f32 %v789, %v789
        %v798 = vmul.f32 %v790, %v790
        %v799 = vmul.f32 %v791, %v791
        %v800 = vmul.f32 %v792, %v792
        %v801 = vmul.f32 %v793, %v793
        %v802 = vmul.f32 %v794, %v794
        %v803 = vmul.f32 %v795, %v795
        %v804 = vmul.f32 %v796, %v796
        %805 = vmatprep.subr.mxu0 0.0
        %806 = vmatpush1.msra.mxu0 %v406
        %807 = vmatprep.subr.mxu0 0.0
        %808 = vmatpush1.msra.mxu0 %v407
        %809 = vmatprep.subr.mxu0 0.0
        %810 = vmatpush1.msra.mxu0 %v408
        %811 = vmatprep.subr.mxu0 0.0
        %812 = vmatpush1.msra.mxu0 %v409
        %813 = vmatprep.subr.mxu0 0.0
        %814 = vmatpush1.msra.mxu0 %v410
        %815 = vmatprep.subr.mxu0 0.0
        %816 = vmatpush1.msra.mxu0 %v411
        %817 = vmatprep.subr.mxu0 0.0
        %818 = vmatpush1.msra.mxu0 %v412
        %819 = vmatprep.subr.mxu0 0.0
        %820 = vmatpush1.msra.mxu0 %v413
        %821 = vmatprep.subr.mxu0 0.0
        %822 = vmatpush1.msra.mxu0 %v414
        %823 = vmatprep.subr.mxu0 0.0
        %824 = vmatpush1.msra.mxu0 %v415
        %825 = vmatprep.subr.mxu0 0.0
        %826 = vmatpush1.msra.mxu0 %v416
        %827 = vmatprep.subr.mxu0 0.0
        %828 = vmatpush1.msra.mxu0 %v417
        %829 = vmatprep.subr.mxu0 0.0
        %830 = vmatpush1.msra.mxu0 %v418
        %831 = vmatprep.subr.mxu0 0.0
        %832 = vmatpush1.msra.mxu0 %v419
        %833 = vmatprep.subr.mxu0 0.0
        %834 = vmatpush1.msra.mxu0 %v420
        %835 = vmatprep.subr.mxu0 0.0
        %836 = vmatpush1.msra.mxu0 %v421
        %837 = vmatprep.subr.mxu0 0.0
        %838 = vmatpush1.msra.mxu0 %v422
        %839 = vmatprep.subr.mxu0 0.0
        %840 = vmatpush1.msra.mxu0 %v423
        %841 = vmatprep.subr.mxu0 0.0
        %842 = vmatpush1.msra.mxu0 %v424
        %843 = vmatprep.subr.mxu0 0.0
        %844 = vmatpush1.msra.mxu0 %v425
        %845 = vmatprep.subr.mxu0 0.0
        %846 = vmatpush1.msra.mxu0 %v426
        %847 = vmatprep.subr.mxu0 0.0
        %848 = vmatpush1.msra.mxu0 %v427
        %849 = vmatprep.subr.mxu0 0.0
        %850 = vmatpush1.msra.mxu0 %v428
        %851 = vmatprep.subr.mxu0 0.0
        %852 = vmatpush1.msra.mxu0 %v429
        %853 = vmatprep.subr.mxu0 0.0
        %854 = vmatpush1.msra.mxu0 %v430
        %855 = vmatprep.subr.mxu0 0.0
        %856 = vmatpush1.msra.mxu0 %v431
        %857 = vmatprep.subr.mxu0 0.0
        %858 = vmatpush1.msra.mxu0 %v432
        %859 = vmatprep.subr.mxu0 0.0
        %860 = vmatpush1.msra.mxu0 %v433
        %861 = vmatprep.subr.mxu0 0.0
        %862 = vmatpush1.msra.mxu0 %v434
        %863 = vmatprep.subr.mxu0 0.0
        %864 = vmatpush1.msra.mxu0 %v435
        %865 = vmatprep.subr.mxu0 0.0
        %866 = vmatpush1.msra.mxu0 %v436
        %867 = vmatprep.subr.mxu0 0.0
        %868 = vmatpush1.msra.mxu0 %v437
        %869 = vmatprep.mubr.f32.mxu0 %v798
        %870 = vmatmul.mubr.f32.gmra.mrb[0].mxu0 %v797
        %v871 = vpop.f32.mrb[0].mxu0
        %v872 = vadd.f32 0.0, %v871
        %v873 = vpop.f32.mrb[0].mxu0
        %874 = vmatprep.mubr.f32.mxu0 %v800
        %875 = vmatmul.mubr.f32.gmra.mrb[0].mxu0 %v799
        %v876 = vpop.f32.mrb[0].mxu0
        %v877 = vadd.f32 0.0, %v876
        %v878 = vpop.f32.mrb[0].mxu0
        %879 = vmatprep.mubr.f32.mxu0 %v802
        %880 = vmatmul.mubr.f32.gmra.mrb[0].mxu0 %v801
        %v881 = vpop.f32.mrb[0].mxu0
        %v882 = vadd.f32 0.0, %v881
        %v883 = vpop.f32.mrb[0].mxu0
        %884 = vmatprep.mubr.f32.mxu0 %v804
        %885 = vmatmul.mubr.f32.gmra.mrb[0].mxu0 %v803
        %v886 = vpop.f32.mrb[0].mxu0
        %v887 = vadd.f32 0.0, %v886
        %v888 = vpop.f32.mrb[0].mxu0
        %889 = vdwg.mxu0
        %890 = vmatprep.subr.mxu0 0.0
        %891 = vmatpush1.msra.mxu0 %v872
        %892 = vmatprep.subr.mxu0 0.0
        %893 = vmatpush1.msra.mxu0 %v877
        %894 = vmatprep.subr.mxu0 0.0
        %895 = vmatpush1.msra.mxu0 %v882
        %896 = vmatprep.subr.mxu0 0.0
        %897 = vmatpush1.msra.mxu0 %v887
        %898 = vmatprep.subr.mxu0 0.0
        %899 = vmatpush1.msra.mxu0 0.0
        %900 = vmatprep.subr.mxu0 0.0
        %901 = vmatpush1.msra.mxu0 0.0
        %902 = vmatprep.subr.mxu0 0.0
        %903 = vmatpush1.msra.mxu0 0.0
        %904 = vmatprep.subr.mxu0 0.0
        %905 = vmatpush1.msra.mxu0 0.0
        %906 = vmatprep.subr.mxu0 0.0
        %907 = vmatpush1.msra.mxu0 0.0
        %908 = vmatprep.subr.mxu0 0.0
        %909 = vmatpush1.msra.mxu0 0.0
        %910 = vmatprep.subr.mxu0 0.0
        %911 = vmatpush1.msra.mxu0 0.0
        %912 = vmatprep.subr.mxu0 0.0
        %913 = vmatpush1.msra.mxu0 0.0
        %914 = vmatprep.subr.mxu0 0.0
        %915 = vmatpush1.msra.mxu0 0.0
        %916 = vmatprep.subr.mxu0 0.0
        %917 = vmatpush1.msra.mxu0 0.0
        %918 = vmatprep.subr.mxu0 0.0
        %919 = vmatpush1.msra.mxu0 0.0
        %920 = vmatprep.subr.mxu0 0.0
        %921 = vmatpush1.msra.mxu0 0.0
        %922 = vmatprep.subr.mxu0 0.0
        %923 = vmatpush1.msra.mxu0 0.0
        %924 = vmatprep.subr.mxu0 0.0
        %925 = vmatpush1.msra.mxu0 0.0
        %926 = vmatprep.subr.mxu0 0.0
        %927 = vmatpush1.msra.mxu0 0.0
        %928 = vmatprep.subr.mxu0 0.0
        %929 = vmatpush1.msra.mxu0 0.0
        %930 = vmatprep.subr.mxu0 0.0
        %931 = vmatpush1.msra.mxu0 0.0
        %932 = vmatprep.subr.mxu0 0.0
        %933 = vmatpush1.msra.mxu0 0.0
        %934 = vmatprep.subr.mxu0 0.0
        %935 = vmatpush1.msra.mxu0 0.0
        %936 = vmatprep.subr.mxu0 0.0
        %937 = vmatpush1.msra.mxu0 0.0
        %938 = vmatprep.subr.mxu0 0.0
        %939 = vmatpush1.msra.mxu0 0.0
        %940 = vmatprep.subr.mxu0 0.0
        %941 = vmatpush1.msra.mxu0 0.0
        %942 = vmatprep.subr.mxu0 0.0
        %943 = vmatpush1.msra.mxu0 0.0
        %944 = vmatprep.subr.mxu0 0.0
        %945 = vmatpush1.msra.mxu0 0.0
        %946 = vmatprep.subr.mxu0 0.0
        %947 = vmatpush1.msra.mxu0 0.0
        %948 = vmatprep.subr.mxu0 0.0
        %949 = vmatpush1.msra.mxu0 0.0
        %950 = vmatprep.subr.mxu0 0.0
        %951 = vmatpush1.msra.mxu0 0.0
        %952 = vmatprep.subr.mxu0 0.0
        %953 = vmatpush1.msra.mxu0 0.0
        %954 = vmatprep.mubr.f32.mxu0 0.0
        %955 = vmatmul.mubr.f32.gmra.mrb[0].mxu0 %v577
        %v956 = vpop.f32.mrb[0].mxu0
        %v957 = vadd.f32 1e-05, %v956
        %v958 = vpop.f32.mrb[0].mxu0
        %959 = vmatprep.mubr.f32.mxu0 0.0
        %960 = vmatmul.mubr.f32.gmra.mrb[0].mxu0 %v580
        %v961 = vpop.f32.mrb[0].mxu0
        %v962 = vadd.f32 1e-05, %v961
        %v963 = vpop.f32.mrb[0].mxu0
        %964 = vmatprep.mubr.f32.mxu0 0.0
        %965 = vmatmul.mubr.f32.gmra.mrb[0].mxu0 %v583
        %v966 = vpop.f32.mrb[0].mxu0
        %v967 = vadd.f32 1e-05, %v966
        %v968 = vpop.f32.mrb[0].mxu0
        %969 = vmatprep.mubr.f32.mxu0 0.0
        %970 = vmatmul.mubr.f32.gmra.mrb[0].mxu0 %v586
        %v971 = vpop.f32.mrb[0].mxu0
        %v972 = vadd.f32 1e-05, %v971
        %v973 = vpop.f32.mrb[0].mxu0
        %974 = vdwg.mxu0
        %v975 = vrsqrt.pop %v957
        %v976 = vrsqrt.pop %v962
        %v977 = vrsqrt.pop %v967
        %v978 = vrsqrt.pop %v972
        %980 = vset.pattern.permute.xlu0 0
        %981 = vperm.xlu0 %980, %v482
        %v982 = vpop.permute.xlu0 %981
        %985 = vset.pattern.permute.xlu0 0
        %986 = vperm.xlu0 %985, %v483
        %v987 = vpop.permute.xlu0 %986
        %990 = vset.pattern.permute.xlu0 0
        %991 = vperm.xlu0 %990, %v484
        %v992 = vpop.permute.xlu0 %991
        %995 = vset.pattern.permute.xlu0 0
        %996 = vperm.xlu0 %995, %v485
        %v997 = vpop.permute.xlu0 %996
        %v999 = vmul.f32 %v975, %v982
        %v1000 = vmul.f32 %v976, %v987
        %v1001 = vmul.f32 %v977, %v992
        %v1002 = vmul.f32 %v978, %v997
        %v1004 = vsel %vm682, %v999, 0
        %v1007 = vsel %vm682, %v1000, 0
        %v1010 = vsel %vm682, %v1001, 0
        %v1013 = vsel %vm682, %v1002, 0
        %1015 = vmatprep.subr.mxu0 %v698
        %1016 = vmatpush1.msra.mxu0 %v696
        %1017 = vmatprep.subr.mxu0 0.0
        %1018 = vmatpush1.msra.mxu0 0.0
        %1019 = vmatprep.subr.mxu0 0.0
        %1020 = vmatpush1.msra.mxu0 0.0
        %1021 = vmatprep.subr.mxu0 0.0
        %1022 = vmatpush1.msra.mxu0 0.0
        %1023 = vmatprep.subr.mxu0 0.0
        %1024 = vmatpush1.msra.mxu0 0.0
        %1025 = vmatprep.subr.mxu0 0.0
        %1026 = vmatpush1.msra.mxu0 0.0
        %1027 = vmatprep.subr.mxu0 0.0
        %1028 = vmatpush1.msra.mxu0 0.0
        %1029 = vmatprep.subr.mxu0 0.0
        %1030 = vmatpush1.msra.mxu0 0.0
        %1031 = vmatprep.subr.mxu0 0.0
        %1032 = vmatpush1.msra.mxu0 0.0
        %1033 = vmatprep.subr.mxu0 0.0
        %1034 = vmatpush1.msra.mxu0 0.0
        %1035 = vmatprep.subr.mxu0 0.0
        %1036 = vmatpush1.msra.mxu0 0.0
        %1037 = vmatprep.subr.mxu0 0.0
        %1038 = vmatpush1.msra.mxu0 0.0
        %1039 = vmatprep.subr.mxu0 0.0
        %1040 = vmatpush1.msra.mxu0 0.0
        %1041 = vmatprep.subr.mxu0 0.0
        %1042 = vmatpush1.msra.mxu0 0.0
        %1043 = vmatprep.subr.mxu0 0.0
        %1044 = vmatpush1.msra.mxu0 0.0
        %1045 = vmatprep.subr.mxu0 0.0
        %1046 = vmatpush1.msra.mxu0 0.0
        %1047 = vmatprep.subr.mxu0 0.0
        %1048 = vmatpush1.msra.mxu0 0.0
        %1049 = vmatprep.subr.mxu0 0.0
        %1050 = vmatpush1.msra.mxu0 0.0
        %1051 = vmatprep.subr.mxu0 0.0
        %1052 = vmatpush1.msra.mxu0 0.0
        %1053 = vmatprep.subr.mxu0 0.0
        %1054 = vmatpush1.msra.mxu0 0.0
        %1055 = vmatprep.subr.mxu0 0.0
        %1056 = vmatpush1.msra.mxu0 0.0
        %1057 = vmatprep.subr.mxu0 0.0
        %1058 = vmatpush1.msra.mxu0 0.0
        %1059 = vmatprep.subr.mxu0 0.0
        %1060 = vmatpush1.msra.mxu0 0.0
        %1061 = vmatprep.subr.mxu0 0.0
        %1062 = vmatpush1.msra.mxu0 0.0
        %1063 = vmatprep.subr.mxu0 0.0
        %1064 = vmatpush1.msra.mxu0 0.0
        %1065 = vmatprep.subr.mxu0 0.0
        %1066 = vmatpush1.msra.mxu0 0.0
        %1067 = vmatprep.subr.mxu0 0.0
        %1068 = vmatpush1.msra.mxu0 0.0
        %1069 = vmatprep.subr.mxu0 0.0
        %1070 = vmatpush1.msra.mxu0 0.0
        %1071 = vmatprep.subr.mxu0 0.0
        %1072 = vmatpush1.msra.mxu0 0.0
        %1073 = vmatprep.subr.mxu0 0.0
        %1074 = vmatpush1.msra.mxu0 0.0
        %1075 = vmatprep.subr.mxu0 0.0
        %1076 = vmatpush1.msra.mxu0 0.0
        %1077 = vmatprep.subr.mxu0 0.0
        %1078 = vmatpush1.msra.mxu0 0.0
        %1079 = vmatprep.mubr.f32.mxu0 0.0
        %1080 = vmatmul.mubr.f32.gmra.mrb[0].mxu0 %v1004
        %v1081 = vpop.f32.mrb[0].mxu0
        %v1082 = vadd.f32 0.0, %v1081
        %v1083 = vpop.f32.mrb[0].mxu0
        %v1084 = vadd.f32 0.0, %v1083
        %1085 = vmatprep.mubr.f32.mxu0 0.0
        %1086 = vmatmul.mubr.f32.gmra.mrb[0].mxu0 %v1007
        %v1087 = vpop.f32.mrb[0].mxu0
        %v1088 = vadd.f32 0.0, %v1087
        %v1089 = vpop.f32.mrb[0].mxu0
        %v1090 = vadd.f32 0.0, %v1089
        %1091 = vmatprep.mubr.f32.mxu0 0.0
        %1092 = vmatmul.mubr.f32.gmra.mrb[0].mxu0 %v1010
        %v1093 = vpop.f32.mrb[0].mxu0
        %v1094 = vadd.f32 0.0, %v1093
        %v1095 = vpop.f32.mrb[0].mxu0
        %v1096 = vadd.f32 0.0, %v1095
        %1097 = vmatprep.mubr.f32.mxu0 0.0
        %1098 = vmatmul.mubr.f32.gmra.mrb[0].mxu0 %v1013
        %v1099 = vpop.f32.mrb[0].mxu0
        %v1100 = vadd.f32 0.0, %v1099
        %v1101 = vpop.f32.mrb[0].mxu0
        %v1102 = vadd.f32 0.0, %v1101
        %1103 = vdwg.mxu0
        %v1104 = vmul.f32 %v789, %v1082
        %v1105 = vmul.f32 %v790, %v1084
        %v1106 = vmul.f32 %v791, %v1088
        %v1107 = vmul.f32 %v792, %v1090
        %v1108 = vmul.f32 %v793, %v1094
        %v1109 = vmul.f32 %v794, %v1096
        %v1110 = vmul.f32 %v795, %v1100
        %v1111 = vmul.f32 %v796, %v1102
        %1113 = vset.pattern.permute.xlu0 0
        %1114 = vperm.xlu0 %1113, %v486
        %v1115 = vpop.permute.xlu0 %1114
        %1118 = vset.pattern.permute.xlu0 0
        %1119 = vperm.xlu0 %1118, %v487
        %v1120 = vpop.permute.xlu0 %1119
        %1123 = vset.pattern.permute.xlu0 0
        %1124 = vperm.xlu0 %1123, %v488
        %v1125 = vpop.permute.xlu0 %1124
        %1128 = vset.pattern.permute.xlu0 0
        %1129 = vperm.xlu0 %1128, %v489
        %v1130 = vpop.permute.xlu0 %1129
        %v1132 = vadd.f32 %v1104, %v1115
        %v1133 = vadd.f32 %v1105, %v1115
        %v1134 = vadd.f32 %v1106, %v1120
        %v1135 = vadd.f32 %v1107, %v1120
        %v1136 = vadd.f32 %v1108, %v1125
        %v1137 = vadd.f32 %v1109, %v1125
        %v1138 = vadd.f32 %v1110, %v1130
        %v1139 = vadd.f32 %v1111, %v1130
        %v1140 = vmax.f32 %v1132, 0.0
        %v1141 = vmax.f32 %v1133, 0.0
        %v1142 = vmax.f32 %v1134, 0.0
        %v1143 = vmax.f32 %v1135, 0.0
        %v1144 = vmax.f32 %v1136, 0.0
        %v1145 = vmax.f32 %v1137, 0.0
        %v1146 = vmax.f32 %v1138, 0.0
        %v1147 = vmax.f32 %v1139, 0.0
        %1148 = vrot.lane.b32.xlu0 %v1140, 2
        %v1149 = vpop.permute.xlu0 %1148
        %1150 = vrot.lane.b32.xlu0 %v1142, 2
        %v1151 = vpop.permute.xlu0 %1150
        %1152 = vrot.lane.b32.xlu0 %v1144, 2
        %v1153 = vpop.permute.xlu0 %1152
        %1154 = vrot.lane.b32.xlu0 %v1146, 2
        %v1155 = vpop.permute.xlu0 %1154
        %1156 = vrot.lane.b32.xlu0 %v1141, 2
        %v1157 = vpop.permute.xlu0 %1156
        %1158 = vrot.lane.b32.xlu0 %v1143, 2
        %v1159 = vpop.permute.xlu0 %1158
        %1160 = vrot.lane.b32.xlu0 %v1145, 2
        %v1161 = vpop.permute.xlu0 %1160
        %1162 = vrot.lane.b32.xlu0 %v1147, 2
        %v1163 = vpop.permute.xlu0 %1162
        %vm1164 = vcmp.lt.s32.totalorder %v440, 2
        %v1165 = vsel %vm1164, %v1149, %v1157
        %v1166 = vsel %vm1164, %v1151, %v1159
        %v1167 = vsel %vm1164, %v1153, %v1161
        %v1168 = vsel %vm1164, %v1155, %v1163
        %v1169 = vsel %vm1164, %v1157, %v1149
        %v1170 = vsel %vm1164, %v1159, %v1151
        %v1171 = vsel %vm1164, %v1161, %v1153
        %v1172 = vsel %vm1164, %v1163, %v1155
        %v1173 = vsel %vm472, 1, 0
        %v1174 = vsel %vm473, 1, 0
        %vm1175 = vcmp.eq.s32.totalorder %v1173, 1
        %vm1176 = vcmp.eq.s32.totalorder %v1174, 1
        %v1177 = vsel %vm1175, %v1169, 0.0
        %v1178 = vsel %vm1176, %v1165, 0.0
        %v1179 = vsel %vm1175, %v1170, 0.0
        %v1180 = vsel %vm1176, %v1166, 0.0
        %v1181 = vsel %vm1175, %v1171, 0.0
        %v1182 = vsel %vm1176, %v1167, 0.0
        %v1183 = vsel %vm1175, %v1172, 0.0
        %v1184 = vsel %vm1176, %v1168, 0.0
        %1185 = vrot.lane.b32.xlu0 %v1140, 126
        %v1186 = vpop.permute.xlu0 %1185
        %1187 = vrot.lane.b32.xlu0 %v1142, 126
        %v1188 = vpop.permute.xlu0 %1187
        %1189 = vrot.lane.b32.xlu0 %v1144, 126
        %v1190 = vpop.permute.xlu0 %1189
        %1191 = vrot.lane.b32.xlu0 %v1146, 126
        %v1192 = vpop.permute.xlu0 %1191
        %1193 = vrot.lane.b32.xlu0 %v1141, 126
        %v1194 = vpop.permute.xlu0 %1193
        %1195 = vrot.lane.b32.xlu0 %v1143, 126
        %v1196 = vpop.permute.xlu0 %1195
        %1197 = vrot.lane.b32.xlu0 %v1145, 126
        %v1198 = vpop.permute.xlu0 %1197
        %1199 = vrot.lane.b32.xlu0 %v1147, 126
        %v1200 = vpop.permute.xlu0 %1199
        %vm1201 = vcmp.lt.s32.totalorder %v440, 126
        %v1202 = vsel %vm1201, %v1186, %v1194
        %v1203 = vsel %vm1201, %v1188, %v1196
        %v1204 = vsel %vm1201, %v1190, %v1198
        %v1205 = vsel %vm1201, %v1192, %v1200
        %v1206 = vsel %vm1201, %v1194, %v1186
        %v1207 = vsel %vm1201, %v1196, %v1188
        %v1208 = vsel %vm1201, %v1198, %v1190
        %v1209 = vsel %vm1201, %v1200, %v1192
        %v1210 = vsel %vm480, 1, 0
        %v1211 = vsel %vm481, 1, 0
        %vm1212 = vcmp.eq.s32.totalorder %v1210, 1
        %vm1213 = vcmp.eq.s32.totalorder %v1211, 1
        %v1214 = vsel %vm1212, %v1202, 0.0
        %v1215 = vsel %vm1213, %v1206, 0.0
        %v1216 = vsel %vm1212, %v1203, 0.0
        %v1217 = vsel %vm1213, %v1207, 0.0
        %v1218 = vsel %vm1212, %v1204, 0.0
        %v1219 = vsel %vm1213, %v1208, 0.0
        %v1220 = vsel %vm1212, %v1205, 0.0
        %v1221 = vsel %vm1213, %v1209, 0.0
        %v1222 = vld [vmem:[%s6] sm:$0xff]
        %v1223 = vld [vmem:[%s6 + $0x8] sm:$0xff]
        %v1224 = vld [vmem:[%s6 + $0x10] sm:$0xff]
        %v1225 = vld [vmem:[%s6 + $0x18] sm:$0xff]
        %vm1226 = vcmask 785408
        %v1228 = vsel %vm1226, %v1222, 0
        %v1231 = vsel %vm1226, %v1223, 0
        %v1234 = vsel %vm1226, %v1224, 0
        %v1237 = vsel %vm1226, %v1225, 0
        %1239 = vmatprep.subr.mxu0 %v1178
        %1240 = vmatpush1.msra.mxu0 %v1177
        %1241 = vmatprep.subr.mxu0 %v1180
        %1242 = vmatpush1.msra.mxu0 %v1179
        %1243 = vmatprep.subr.mxu0 %v1182
        %1244 = vmatpush1.msra.mxu0 %v1181
        %1245 = vmatprep.subr.mxu0 %v1184
        %1246 = vmatpush1.msra.mxu0 %v1183
        %1247 = vmatprep.subr.mxu0 %v1141
        %1248 = vmatpush1.msra.mxu0 %v1140
        %1249 = vmatprep.subr.mxu0 %v1143
        %1250 = vmatpush1.msra.mxu0 %v1142
        %1251 = vmatprep.subr.mxu0 %v1145
        %1252 = vmatpush1.msra.mxu0 %v1144
        %1253 = vmatprep.subr.mxu0 %v1147
        %1254 = vmatpush1.msra.mxu0 %v1146
        %1255 = vmatprep.subr.mxu0 %v1215
        %1256 = vmatpush1.msra.mxu0 %v1214
        %1257 = vmatprep.subr.mxu0 %v1217
        %1258 = vmatpush1.msra.mxu0 %v1216
        %1259 = vmatprep.subr.mxu0 %v1219
        %1260 = vmatpush1.msra.mxu0 %v1218
        %1261 = vmatprep.subr.mxu0 %v1221
        %1262 = vmatpush1.msra.mxu0 %v1220
        %1263 = vmatprep.subr.mxu0 0.0
        %1264 = vmatpush1.msra.mxu0 0.0
        %1265 = vmatprep.subr.mxu0 0.0
        %1266 = vmatpush1.msra.mxu0 0.0
        %1267 = vmatprep.subr.mxu0 0.0
        %1268 = vmatpush1.msra.mxu0 0.0
        %1269 = vmatprep.subr.mxu0 0.0
        %1270 = vmatpush1.msra.mxu0 0.0
        %1271 = vmatprep.subr.mxu0 0.0
        %1272 = vmatpush1.msra.mxu0 0.0
        %1273 = vmatprep.subr.mxu0 0.0
        %1274 = vmatpush1.msra.mxu0 0.0
        %1275 = vmatprep.subr.mxu0 0.0
        %1276 = vmatpush1.msra.mxu0 0.0
        %1277 = vmatprep.subr.mxu0 0.0
        %1278 = vmatpush1.msra.mxu0 0.0
        %1279 = vmatprep.subr.mxu0 0.0
        %1280 = vmatpush1.msra.mxu0 0.0
        %1281 = vmatprep.subr.mxu0 0.0
        %1282 = vmatpush1.msra.mxu0 0.0
        %1283 = vmatprep.subr.mxu0 0.0
        %1284 = vmatpush1.msra.mxu0 0.0
        %1285 = vmatprep.subr.mxu0 0.0
        %1286 = vmatpush1.msra.mxu0 0.0
        %1287 = vmatprep.subr.mxu0 0.0
        %1288 = vmatpush1.msra.mxu0 0.0
        %1289 = vmatprep.subr.mxu0 0.0
        %1290 = vmatpush1.msra.mxu0 0.0
        %1291 = vmatprep.subr.mxu0 0.0
        %1292 = vmatpush1.msra.mxu0 0.0
        %1293 = vmatprep.subr.mxu0 0.0
        %1294 = vmatpush1.msra.mxu0 0.0
        %1295 = vmatprep.subr.mxu0 0.0
        %1296 = vmatpush1.msra.mxu0 0.0
        %1297 = vmatprep.subr.mxu0 0.0
        %1298 = vmatpush1.msra.mxu0 0.0
        %1299 = vmatprep.subr.mxu0 0.0
        %1300 = vmatpush1.msra.mxu0 0.0
        %1301 = vmatprep.subr.mxu0 0.0
        %1302 = vmatpush1.msra.mxu0 0.0
        %1303 = vmatprep.mubr.f32.mxu0 0.0
        %1304 = vmatmul.mubr.f32.gmra.mrb[0].mxu0 %v1228
        %v1305 = vpop.f32.mrb[0].mxu0
        %v1306 = vadd.f32 0.0, %v1305
        %v1307 = vpop.f32.mrb[0].mxu0
        %v1308 = vadd.f32 0.0, %v1307
        %1309 = vmatprep.mubr.f32.mxu0 0.0
        %1310 = vmatmul.mubr.f32.gmra.mrb[0].mxu0 %v1231
        %v1311 = vpop.f32.mrb[0].mxu0
        %v1312 = vadd.f32 0.0, %v1311
        %v1313 = vpop.f32.mrb[0].mxu0
        %v1314 = vadd.f32 0.0, %v1313
        %1315 = vmatprep.mubr.f32.mxu0 0.0
        %1316 = vmatmul.mubr.f32.gmra.mrb[0].mxu0 %v1234
        %v1317 = vpop.f32.mrb[0].mxu0
        %v1318 = vadd.f32 0.0, %v1317
        %v1319 = vpop.f32.mrb[0].mxu0
        %v1320 = vadd.f32 0.0, %v1319
        %1321 = vmatprep.mubr.f32.mxu0 0.0
        %1322 = vmatmul.mubr.f32.gmra.mrb[0].mxu0 %v1237
        %v1323 = vpop.f32.mrb[0].mxu0
        %v1324 = vadd.f32 0.0, %v1323
        %v1325 = vpop.f32.mrb[0].mxu0
        %v1326 = vadd.f32 0.0, %v1325
        %1327 = vdwg.mxu0
        %v1328 = vld [vmem:[%s7] sm:$0xff]
        %v1329 = vld [vmem:[%s7 + $0x8] sm:$0xff]
        %v1330 = vld [vmem:[%s7 + $0x10] sm:$0xff]
        %v1331 = vld [vmem:[%s7 + $0x18] sm:$0xff]
        %v1332 = vld [vmem:[%s8] sm:$0xff]
        %v1333 = vld [vmem:[%s8 + $0x8] sm:$0xff]
        %v1334 = vld [vmem:[%s8 + $0x10] sm:$0xff]
        %v1335 = vld [vmem:[%s8 + $0x18] sm:$0xff]
        %1336 = vmatprep.subr.mxu0 0.0
        %1337 = vmatpush1.msra.mxu0 %v406
        %1338 = vmatprep.subr.mxu0 0.0
        %1339 = vmatpush1.msra.mxu0 %v407
        %1340 = vmatprep.subr.mxu0 0.0
        %1341 = vmatpush1.msra.mxu0 %v408
        %1342 = vmatprep.subr.mxu0 0.0
        %1343 = vmatpush1.msra.mxu0 %v409
        %1344 = vmatprep.subr.mxu0 0.0
        %1345 = vmatpush1.msra.mxu0 %v410
        %1346 = vmatprep.subr.mxu0 0.0
        %1347 = vmatpush1.msra.mxu0 %v411
        %1348 = vmatprep.subr.mxu0 0.0
        %1349 = vmatpush1.msra.mxu0 %v412
        %1350 = vmatprep.subr.mxu0 0.0
        %1351 = vmatpush1.msra.mxu0 %v413
        %1352 = vmatprep.subr.mxu0 0.0
        %1353 = vmatpush1.msra.mxu0 %v414
        %1354 = vmatprep.subr.mxu0 0.0
        %1355 = vmatpush1.msra.mxu0 %v415
        %1356 = vmatprep.subr.mxu0 0.0
        %1357 = vmatpush1.msra.mxu0 %v416
        %1358 = vmatprep.subr.mxu0 0.0
        %1359 = vmatpush1.msra.mxu0 %v417
        %1360 = vmatprep.subr.mxu0 0.0
        %1361 = vmatpush1.msra.mxu0 %v418
        %1362 = vmatprep.subr.mxu0 0.0
        %1363 = vmatpush1.msra.mxu0 %v419
        %1364 = vmatprep.subr.mxu0 0.0
        %1365 = vmatpush1.msra.mxu0 %v420
        %1366 = vmatprep.subr.mxu0 0.0
        %1367 = vmatpush1.msra.mxu0 %v421
        %1368 = vmatprep.subr.mxu0 0.0
        %1369 = vmatpush1.msra.mxu0 %v422
        %1370 = vmatprep.subr.mxu0 0.0
        %1371 = vmatpush1.msra.mxu0 %v423
        %1372 = vmatprep.subr.mxu0 0.0
        %1373 = vmatpush1.msra.mxu0 %v424
        %1374 = vmatprep.subr.mxu0 0.0
        %1375 = vmatpush1.msra.mxu0 %v425
        %1376 = vmatprep.subr.mxu0 0.0
        %1377 = vmatpush1.msra.mxu0 %v426
        %1378 = vmatprep.subr.mxu0 0.0
        %1379 = vmatpush1.msra.mxu0 %v427
        %1380 = vmatprep.subr.mxu0 0.0
        %1381 = vmatpush1.msra.mxu0 %v428
        %1382 = vmatprep.subr.mxu0 0.0
        %1383 = vmatpush1.msra.mxu0 %v429
        %1384 = vmatprep.subr.mxu0 0.0
        %1385 = vmatpush1.msra.mxu0 %v430
        %1386 = vmatprep.subr.mxu0 0.0
        %1387 = vmatpush1.msra.mxu0 %v431
        %1388 = vmatprep.subr.mxu0 0.0
        %1389 = vmatpush1.msra.mxu0 %v432
        %1390 = vmatprep.subr.mxu0 0.0
        %1391 = vmatpush1.msra.mxu0 %v433
        %1392 = vmatprep.subr.mxu0 0.0
        %1393 = vmatpush1.msra.mxu0 %v434
        %1394 = vmatprep.subr.mxu0 0.0
        %1395 = vmatpush1.msra.mxu0 %v435
        %1396 = vmatprep.subr.mxu0 0.0
        %1397 = vmatpush1.msra.mxu0 %v436
        %1398 = vmatprep.subr.mxu0 0.0
        %1399 = vmatpush1.msra.mxu0 %v437
        %1400 = vmatprep.mubr.f32.mxu0 %v1308
        %1401 = vmatmul.mubr.f32.gmra.mrb[0].mxu0 %v1306
        %v1402 = vpop.f32.mrb[0].mxu0
        %v1403 = vadd.f32 0.0, %v1402
        %v1404 = vpop.f32.mrb[0].mxu0
        %1405 = vmatprep.mubr.f32.mxu0 %v1314
        %1406 = vmatmul.mubr.f32.gmra.mrb[0].mxu0 %v1312
        %v1407 = vpop.f32.mrb[0].mxu0
        %v1408 = vadd.f32 0.0, %v1407
        %v1409 = vpop.f32.mrb[0].mxu0
        %1410 = vmatprep.mubr.f32.mxu0 %v1320
        %1411 = vmatmul.mubr.f32.gmra.mrb[0].mxu0 %v1318
        %v1412 = vpop.f32.mrb[0].mxu0
        %v1413 = vadd.f32 0.0, %v1412
        %v1414 = vpop.f32.mrb[0].mxu0
        %1415 = vmatprep.mubr.f32.mxu0 %v1326
        %1416 = vmatmul.mubr.f32.gmra.mrb[0].mxu0 %v1324
        %v1417 = vpop.f32.mrb[0].mxu0
        %v1418 = vadd.f32 0.0, %v1417
        %v1419 = vpop.f32.mrb[0].mxu0
        %1420 = vdwg.mxu0
        %1421 = vmatprep.subr.mxu0 0.0
        %1422 = vmatpush1.msra.mxu0 %v1403
        %1423 = vmatprep.subr.mxu0 0.0
        %1424 = vmatpush1.msra.mxu0 %v1408
        %1425 = vmatprep.subr.mxu0 0.0
        %1426 = vmatpush1.msra.mxu0 %v1413
        %1427 = vmatprep.subr.mxu0 0.0
        %1428 = vmatpush1.msra.mxu0 %v1418
        %1429 = vmatprep.subr.mxu0 0.0
        %1430 = vmatpush1.msra.mxu0 0.0
        %1431 = vmatprep.subr.mxu0 0.0
        %1432 = vmatpush1.msra.mxu0 0.0
        %1433 = vmatprep.subr.mxu0 0.0
        %1434 = vmatpush1.msra.mxu0 0.0
        %1435 = vmatprep.subr.mxu0 0.0
        %1436 = vmatpush1.msra.mxu0 0.0
        %1437 = vmatprep.subr.mxu0 0.0
        %1438 = vmatpush1.msra.mxu0 0.0
        %1439 = vmatprep.subr.mxu0 0.0
        %1440 = vmatpush1.msra.mxu0 0.0
        %1441 = vmatprep.subr.mxu0 0.0
        %1442 = vmatpush1.msra.mxu0 0.0
        %1443 = vmatprep.subr.mxu0 0.0
        %1444 = vmatpush1.msra.mxu0 0.0
        %1445 = vmatprep.subr.mxu0 0.0
        %1446 = vmatpush1.msra.mxu0 0.0
        %1447 = vmatprep.subr.mxu0 0.0
        %1448 = vmatpush1.msra.mxu0 0.0
        %1449 = vmatprep.subr.mxu0 0.0
        %1450 = vmatpush1.msra.mxu0 0.0
        %1451 = vmatprep.subr.mxu0 0.0
        %1452 = vmatpush1.msra.mxu0 0.0
        %1453 = vmatprep.subr.mxu0 0.0
        %1454 = vmatpush1.msra.mxu0 0.0
        %1455 = vmatprep.subr.mxu0 0.0
        %1456 = vmatpush1.msra.mxu0 0.0
        %1457 = vmatprep.subr.mxu0 0.0
        %1458 = vmatpush1.msra.mxu0 0.0
        %1459 = vmatprep.subr.mxu0 0.0
        %1460 = vmatpush1.msra.mxu0 0.0
        %1461 = vmatprep.subr.mxu0 0.0
        %1462 = vmatpush1.msra.mxu0 0.0
        %1463 = vmatprep.subr.mxu0 0.0
        %1464 = vmatpush1.msra.mxu0 0.0
        %1465 = vmatprep.subr.mxu0 0.0
        %1466 = vmatpush1.msra.mxu0 0.0
        %1467 = vmatprep.subr.mxu0 0.0
        %1468 = vmatpush1.msra.mxu0 0.0
        %1469 = vmatprep.subr.mxu0 0.0
        %1470 = vmatpush1.msra.mxu0 0.0
        %1471 = vmatprep.subr.mxu0 0.0
        %1472 = vmatpush1.msra.mxu0 0.0
        %1473 = vmatprep.subr.mxu0 0.0
        %1474 = vmatpush1.msra.mxu0 0.0
        %1475 = vmatprep.subr.mxu0 0.0
        %1476 = vmatpush1.msra.mxu0 0.0
        %1477 = vmatprep.subr.mxu0 0.0
        %1478 = vmatpush1.msra.mxu0 0.0
        %1479 = vmatprep.subr.mxu0 0.0
        %1480 = vmatpush1.msra.mxu0 0.0
        %1481 = vmatprep.subr.mxu0 0.0
        %1482 = vmatpush1.msra.mxu0 0.0
        %1483 = vmatprep.subr.mxu0 0.0
        %1484 = vmatpush1.msra.mxu0 0.0
        %1485 = vmatprep.mubr.f32.mxu0 0.0
        %1486 = vmatmul.mubr.f32.gmra.mrb[0].mxu0 %v577
        %v1487 = vpop.f32.mrb[0].mxu0
        %v1488 = vadd.f32 0.0, %v1487
        %v1489 = vpop.f32.mrb[0].mxu0
        %1490 = vmatprep.mubr.f32.mxu0 0.0
        %1491 = vmatmul.mubr.f32.gmra.mrb[0].mxu0 %v580
        %v1492 = vpop.f32.mrb[0].mxu0
        %v1493 = vadd.f32 0.0, %v1492
        %v1494 = vpop.f32.mrb[0].mxu0
        %1495 = vmatprep.mubr.f32.mxu0 0.0
        %1496 = vmatmul.mubr.f32.gmra.mrb[0].mxu0 %v583
        %v1497 = vpop.f32.mrb[0].mxu0
        %v1498 = vadd.f32 0.0, %v1497
        %v1499 = vpop.f32.mrb[0].mxu0
        %1500 = vmatprep.mubr.f32.mxu0 0.0
        %1501 = vmatmul.mubr.f32.gmra.mrb[0].mxu0 %v586
        %v1502 = vpop.f32.mrb[0].mxu0
        %v1503 = vadd.f32 0.0, %v1502
        %v1504 = vpop.f32.mrb[0].mxu0
        %1505 = vdwg.mxu0
        %v1507 = vsel %vm682, %v1488, 0
        %v1510 = vsel %vm682, %v1493, 0
        %v1513 = vsel %vm682, %v1498, 0
        %v1516 = vsel %vm682, %v1503, 0
        %1518 = vmatprep.subr.mxu0 %v698
        %1519 = vmatpush1.msra.mxu0 %v696
        %1520 = vmatprep.subr.mxu0 0.0
        %1521 = vmatpush1.msra.mxu0 0.0
        %1522 = vmatprep.subr.mxu0 0.0
        %1523 = vmatpush1.msra.mxu0 0.0
        %1524 = vmatprep.subr.mxu0 0.0
        %1525 = vmatpush1.msra.mxu0 0.0
        %1526 = vmatprep.subr.mxu0 0.0
        %1527 = vmatpush1.msra.mxu0 0.0
        %1528 = vmatprep.subr.mxu0 0.0
        %1529 = vmatpush1.msra.mxu0 0.0
        %1530 = vmatprep.subr.mxu0 0.0
        %1531 = vmatpush1.msra.mxu0 0.0
        %1532 = vmatprep.subr.mxu0 0.0
        %1533 = vmatpush1.msra.mxu0 0.0
        %1534 = vmatprep.subr.mxu0 0.0
        %1535 = vmatpush1.msra.mxu0 0.0
        %1536 = vmatprep.subr.mxu0 0.0
        %1537 = vmatpush1.msra.mxu0 0.0
        %1538 = vmatprep.subr.mxu0 0.0
        %1539 = vmatpush1.msra.mxu0 0.0
        %1540 = vmatprep.subr.mxu0 0.0
        %1541 = vmatpush1.msra.mxu0 0.0
        %1542 = vmatprep.subr.mxu0 0.0
        %1543 = vmatpush1.msra.mxu0 0.0
        %1544 = vmatprep.subr.mxu0 0.0
        %1545 = vmatpush1.msra.mxu0 0.0
        %1546 = vmatprep.subr.mxu0 0.0
        %1547 = vmatpush1.msra.mxu0 0.0
        %1548 = vmatprep.subr.mxu0 0.0
        %1549 = vmatpush1.msra.mxu0 0.0
        %1550 = vmatprep.subr.mxu0 0.0
        %1551 = vmatpush1.msra.mxu0 0.0
        %1552 = vmatprep.subr.mxu0 0.0
        %1553 = vmatpush1.msra.mxu0 0.0
        %1554 = vmatprep.subr.mxu0 0.0
        %1555 = vmatpush1.msra.mxu0 0.0
        %1556 = vmatprep.subr.mxu0 0.0
        %1557 = vmatpush1.msra.mxu0 0.0
        %1558 = vmatprep.subr.mxu0 0.0
        %1559 = vmatpush1.msra.mxu0 0.0
        %1560 = vmatprep.subr.mxu0 0.0
        %1561 = vmatpush1.msra.mxu0 0.0
        %1562 = vmatprep.subr.mxu0 0.0
        %1563 = vmatpush1.msra.mxu0 0.0
        %1564 = vmatprep.subr.mxu0 0.0
        %1565 = vmatpush1.msra.mxu0 0.0
        %1566 = vmatprep.subr.mxu0 0.0
        %1567 = vmatpush1.msra.mxu0 0.0
        %1568 = vmatprep.subr.mxu0 0.0
        %1569 = vmatpush1.msra.mxu0 0.0
        %1570 = vmatprep.subr.mxu0 0.0
        %1571 = vmatpush1.msra.mxu0 0.0
        %1572 = vmatprep.subr.mxu0 0.0
        %1573 = vmatpush1.msra.mxu0 0.0
        %1574 = vmatprep.subr.mxu0 0.0
        %1575 = vmatpush1.msra.mxu0 0.0
        %1576 = vmatprep.subr.mxu0 0.0
        %1577 = vmatpush1.msra.mxu0 0.0
        %1578 = vmatprep.subr.mxu0 0.0
        %1579 = vmatpush1.msra.mxu0 0.0
        %1580 = vmatprep.subr.mxu0 0.0
        %1581 = vmatpush1.msra.mxu0 0.0
        %1582 = vmatprep.mubr.f32.mxu0 0.0
        %1583 = vmatmul.mubr.f32.gmra.mrb[0].mxu0 %v1507
        %v1584 = vpop.f32.mrb[0].mxu0
        %v1585 = vadd.f32 0.0, %v1584
        %v1586 = vpop.f32.mrb[0].mxu0
        %v1587 = vadd.f32 0.0, %v1586
        %1588 = vmatprep.mubr.f32.mxu0 0.0
        %1589 = vmatmul.mubr.f32.gmra.mrb[0].mxu0 %v1510
        %v1590 = vpop.f32.mrb[0].mxu0
        %v1591 = vadd.f32 0.0, %v1590
        %v1592 = vpop.f32.mrb[0].mxu0
        %v1593 = vadd.f32 0.0, %v1592
        %1594 = vmatprep.mubr.f32.mxu0 0.0
        %1595 = vmatmul.mubr.f32.gmra.mrb[0].mxu0 %v1513
        %v1596 = vpop.f32.mrb[0].mxu0
        %v1597 = vadd.f32 0.0, %v1596
        %v1598 = vpop.f32.mrb[0].mxu0
        %v1599 = vadd.f32 0.0, %v1598
        %1600 = vmatprep.mubr.f32.mxu0 0.0
        %1601 = vmatmul.mubr.f32.gmra.mrb[0].mxu0 %v1516
        %v1602 = vpop.f32.mrb[0].mxu0
        %v1603 = vadd.f32 0.0, %v1602
        %v1604 = vpop.f32.mrb[0].mxu0
        %v1605 = vadd.f32 0.0, %v1604
        %1606 = vdwg.mxu0
        %v1607 = vsub.f32 %v1306, %v1585
        %v1608 = vsub.f32 %v1308, %v1587
        %v1609 = vsub.f32 %v1312, %v1591
        %v1610 = vsub.f32 %v1314, %v1593
        %v1611 = vsub.f32 %v1318, %v1597
        %v1612 = vsub.f32 %v1320, %v1599
        %v1613 = vsub.f32 %v1324, %v1603
        %v1614 = vsub.f32 %v1326, %v1605
        %v1615 = vmul.f32 %v1607, %v1607
        %v1616 = vmul.f32 %v1608, %v1608
        %v1617 = vmul.f32 %v1609, %v1609
        %v1618 = vmul.f32 %v1610, %v1610
        %v1619 = vmul.f32 %v1611, %v1611
        %v1620 = vmul.f32 %v1612, %v1612
        %v1621 = vmul.f32 %v1613, %v1613
        %v1622 = vmul.f32 %v1614, %v1614
        %1623 = vmatprep.subr.mxu0 0.0
        %1624 = vmatpush1.msra.mxu0 %v406
        %1625 = vmatprep.subr.mxu0 0.0
        %1626 = vmatpush1.msra.mxu0 %v407
        %1627 = vmatprep.subr.mxu0 0.0
        %1628 = vmatpush1.msra.mxu0 %v408
        %1629 = vmatprep.subr.mxu0 0.0
        %1630 = vmatpush1.msra.mxu0 %v409
        %1631 = vmatprep.subr.mxu0 0.0
        %1632 = vmatpush1.msra.mxu0 %v410
        %1633 = vmatprep.subr.mxu0 0.0
        %1634 = vmatpush1.msra.mxu0 %v411
        %1635 = vmatprep.subr.mxu0 0.0
        %1636 = vmatpush1.msra.mxu0 %v412
        %1637 = vmatprep.subr.mxu0 0.0
        %1638 = vmatpush1.msra.mxu0 %v413
        %1639 = vmatprep.subr.mxu0 0.0
        %1640 = vmatpush1.msra.mxu0 %v414
        %1641 = vmatprep.subr.mxu0 0.0
        %1642 = vmatpush1.msra.mxu0 %v415
        %1643 = vmatprep.subr.mxu0 0.0
        %1644 = vmatpush1.msra.mxu0 %v416
        %1645 = vmatprep.subr.mxu0 0.0
        %1646 = vmatpush1.msra.mxu0 %v417
        %1647 = vmatprep.subr.mxu0 0.0
        %1648 = vmatpush1.msra.mxu0 %v418
        %1649 = vmatprep.subr.mxu0 0.0
        %1650 = vmatpush1.msra.mxu0 %v419
        %1651 = vmatprep.subr.mxu0 0.0
        %1652 = vmatpush1.msra.mxu0 %v420
        %1653 = vmatprep.subr.mxu0 0.0
        %1654 = vmatpush1.msra.mxu0 %v421
        %1655 = vmatprep.subr.mxu0 0.0
        %1656 = vmatpush1.msra.mxu0 %v422
        %1657 = vmatprep.subr.mxu0 0.0
        %1658 = vmatpush1.msra.mxu0 %v423
        %1659 = vmatprep.subr.mxu0 0.0
        %1660 = vmatpush1.msra.mxu0 %v424
        %1661 = vmatprep.subr.mxu0 0.0
        %1662 = vmatpush1.msra.mxu0 %v425
        %1663 = vmatprep.subr.mxu0 0.0
        %1664 = vmatpush1.msra.mxu0 %v426
        %1665 = vmatprep.subr.mxu0 0.0
        %1666 = vmatpush1.msra.mxu0 %v427
        %1667 = vmatprep.subr.mxu0 0.0
        %1668 = vmatpush1.msra.mxu0 %v428
        %1669 = vmatprep.subr.mxu0 0.0
        %1670 = vmatpush1.msra.mxu0 %v429
        %1671 = vmatprep.subr.mxu0 0.0
        %1672 = vmatpush1.msra.mxu0 %v430
        %1673 = vmatprep.subr.mxu0 0.0
        %1674 = vmatpush1.msra.mxu0 %v431
        %1675 = vmatprep.subr.mxu0 0.0
        %1676 = vmatpush1.msra.mxu0 %v432
        %1677 = vmatprep.subr.mxu0 0.0
        %1678 = vmatpush1.msra.mxu0 %v433
        %1679 = vmatprep.subr.mxu0 0.0
        %1680 = vmatpush1.msra.mxu0 %v434
        %1681 = vmatprep.subr.mxu0 0.0
        %1682 = vmatpush1.msra.mxu0 %v435
        %1683 = vmatprep.subr.mxu0 0.0
        %1684 = vmatpush1.msra.mxu0 %v436
        %1685 = vmatprep.subr.mxu0 0.0
        %1686 = vmatpush1.msra.mxu0 %v437
        %1687 = vmatprep.mubr.f32.mxu0 %v1616
        %1688 = vmatmul.mubr.f32.gmra.mrb[0].mxu0 %v1615
        %v1689 = vpop.f32.mrb[0].mxu0
        %v1690 = vadd.f32 0.0, %v1689
        %v1691 = vpop.f32.mrb[0].mxu0
        %1692 = vmatprep.mubr.f32.mxu0 %v1618
        %1693 = vmatmul.mubr.f32.gmra.mrb[0].mxu0 %v1617
        %v1694 = vpop.f32.mrb[0].mxu0
        %v1695 = vadd.f32 0.0, %v1694
        %v1696 = vpop.f32.mrb[0].mxu0
        %1697 = vmatprep.mubr.f32.mxu0 %v1620
        %1698 = vmatmul.mubr.f32.gmra.mrb[0].mxu0 %v1619
        %v1699 = vpop.f32.mrb[0].mxu0
        %v1700 = vadd.f32 0.0, %v1699
        %v1701 = vpop.f32.mrb[0].mxu0
        %1702 = vmatprep.mubr.f32.mxu0 %v1622
        %1703 = vmatmul.mubr.f32.gmra.mrb[0].mxu0 %v1621
        %v1704 = vpop.f32.mrb[0].mxu0
        %v1705 = vadd.f32 0.0, %v1704
        %v1706 = vpop.f32.mrb[0].mxu0
        %1707 = vdwg.mxu0
        %1708 = vmatprep.subr.mxu0 0.0
        %1709 = vmatpush1.msra.mxu0 %v1690
        %1710 = vmatprep.subr.mxu0 0.0
        %1711 = vmatpush1.msra.mxu0 %v1695
        %1712 = vmatprep.subr.mxu0 0.0
        %1713 = vmatpush1.msra.mxu0 %v1700
        %1714 = vmatprep.subr.mxu0 0.0
        %1715 = vmatpush1.msra.mxu0 %v1705
        %1716 = vmatprep.subr.mxu0 0.0
        %1717 = vmatpush1.msra.mxu0 0.0
        %1718 = vmatprep.subr.mxu0 0.0
        %1719 = vmatpush1.msra.mxu0 0.0
        %1720 = vmatprep.subr.mxu0 0.0
        %1721 = vmatpush1.msra.mxu0 0.0
        %1722 = vmatprep.subr.mxu0 0.0
        %1723 = vmatpush1.msra.mxu0 0.0
        %1724 = vmatprep.subr.mxu0 0.0
        %1725 = vmatpush1.msra.mxu0 0.0
        %1726 = vmatprep.subr.mxu0 0.0
        %1727 = vmatpush1.msra.mxu0 0.0
        %1728 = vmatprep.subr.mxu0 0.0
        %1729 = vmatpush1.msra.mxu0 0.0
        %1730 = vmatprep.subr.mxu0 0.0
        %1731 = vmatpush1.msra.mxu0 0.0
        %1732 = vmatprep.subr.mxu0 0.0
        %1733 = vmatpush1.msra.mxu0 0.0
        %1734 = vmatprep.subr.mxu0 0.0
        %1735 = vmatpush1.msra.mxu0 0.0
        %1736 = vmatprep.subr.mxu0 0.0
        %1737 = vmatpush1.msra.mxu0 0.0
        %1738 = vmatprep.subr.mxu0 0.0
        %1739 = vmatpush1.msra.mxu0 0.0
        %1740 = vmatprep.subr.mxu0 0.0
        %1741 = vmatpush1.msra.mxu0 0.0
        %1742 = vmatprep.subr.mxu0 0.0
        %1743 = vmatpush1.msra.mxu0 0.0
        %1744 = vmatprep.subr.mxu0 0.0
        %1745 = vmatpush1.msra.mxu0 0.0
        %1746 = vmatprep.subr.mxu0 0.0
        %1747 = vmatpush1.msra.mxu0 0.0
        %1748 = vmatprep.subr.mxu0 0.0
        %1749 = vmatpush1.msra.mxu0 0.0
        %1750 = vmatprep.subr.mxu0 0.0
        %1751 = vmatpush1.msra.mxu0 0.0
        %1752 = vmatprep.subr.mxu0 0.0
        %1753 = vmatpush1.msra.mxu0 0.0
        %1754 = vmatprep.subr.mxu0 0.0
        %1755 = vmatpush1.msra.mxu0 0.0
        %1756 = vmatprep.subr.mxu0 0.0
        %1757 = vmatpush1.msra.mxu0 0.0
        %1758 = vmatprep.subr.mxu0 0.0
        %1759 = vmatpush1.msra.mxu0 0.0
        %1760 = vmatprep.subr.mxu0 0.0
        %1761 = vmatpush1.msra.mxu0 0.0
        %1762 = vmatprep.subr.mxu0 0.0
        %1763 = vmatpush1.msra.mxu0 0.0
        %1764 = vmatprep.subr.mxu0 0.0
        %1765 = vmatpush1.msra.mxu0 0.0
        %1766 = vmatprep.subr.mxu0 0.0
        %1767 = vmatpush1.msra.mxu0 0.0
        %1768 = vmatprep.subr.mxu0 0.0
        %1769 = vmatpush1.msra.mxu0 0.0
        %1770 = vmatprep.subr.mxu0 0.0
        %1771 = vmatpush1.msra.mxu0 0.0
        %1772 = vmatprep.mubr.f32.mxu0 0.0
        %1773 = vmatmul.mubr.f32.gmra.mrb[0].mxu0 %v577
        %v1774 = vpop.f32.mrb[0].mxu0
        %v1775 = vadd.f32 1e-05, %v1774
        %v1776 = vpop.f32.mrb[0].mxu0
        %1777 = vmatprep.mubr.f32.mxu0 0.0
        %1778 = vmatmul.mubr.f32.gmra.mrb[0].mxu0 %v580
        %v1779 = vpop.f32.mrb[0].mxu0
        %v1780 = vadd.f32 1e-05, %v1779
        %v1781 = vpop.f32.mrb[0].mxu0
        %1782 = vmatprep.mubr.f32.mxu0 0.0
        %1783 = vmatmul.mubr.f32.gmra.mrb[0].mxu0 %v583
        %v1784 = vpop.f32.mrb[0].mxu0
        %v1785 = vadd.f32 1e-05, %v1784
        %v1786 = vpop.f32.mrb[0].mxu0
        %1787 = vmatprep.mubr.f32.mxu0 0.0
        %1788 = vmatmul.mubr.f32.gmra.mrb[0].mxu0 %v586
        %v1789 = vpop.f32.mrb[0].mxu0
        %v1790 = vadd.f32 1e-05, %v1789
        %v1791 = vpop.f32.mrb[0].mxu0
        %1792 = vdwg.mxu0
        %v1793 = vrsqrt.pop %v1775
        %v1794 = vrsqrt.pop %v1780
        %v1795 = vrsqrt.pop %v1785
        %v1796 = vrsqrt.pop %v1790
        %1798 = vset.pattern.permute.xlu0 0
        %1799 = vperm.xlu0 %1798, %v1328
        %v1800 = vpop.permute.xlu0 %1799
        %1803 = vset.pattern.permute.xlu0 0
        %1804 = vperm.xlu0 %1803, %v1329
        %v1805 = vpop.permute.xlu0 %1804
        %1808 = vset.pattern.permute.xlu0 0
        %1809 = vperm.xlu0 %1808, %v1330
        %v1810 = vpop.permute.xlu0 %1809
        %1813 = vset.pattern.permute.xlu0 0
        %1814 = vperm.xlu0 %1813, %v1331
        %v1815 = vpop.permute.xlu0 %1814
        %v1817 = vmul.f32 %v1793, %v1800
        %v1818 = vmul.f32 %v1794, %v1805
        %v1819 = vmul.f32 %v1795, %v1810
        %v1820 = vmul.f32 %v1796, %v1815
        %v1822 = vsel %vm682, %v1817, 0
        %v1825 = vsel %vm682, %v1818, 0
        %v1828 = vsel %vm682, %v1819, 0
        %v1831 = vsel %vm682, %v1820, 0
        %1833 = vmatprep.subr.mxu0 %v698
        %1834 = vmatpush1.msra.mxu0 %v696
        %1835 = vmatprep.subr.mxu0 0.0
        %1836 = vmatpush1.msra.mxu0 0.0
        %1837 = vmatprep.subr.mxu0 0.0
        %1838 = vmatpush1.msra.mxu0 0.0
        %1839 = vmatprep.subr.mxu0 0.0
        %1840 = vmatpush1.msra.mxu0 0.0
        %1841 = vmatprep.subr.mxu0 0.0
        %1842 = vmatpush1.msra.mxu0 0.0
        %1843 = vmatprep.subr.mxu0 0.0
        %1844 = vmatpush1.msra.mxu0 0.0
        %1845 = vmatprep.subr.mxu0 0.0
        %1846 = vmatpush1.msra.mxu0 0.0
        %1847 = vmatprep.subr.mxu0 0.0
        %1848 = vmatpush1.msra.mxu0 0.0
        %1849 = vmatprep.subr.mxu0 0.0
        %1850 = vmatpush1.msra.mxu0 0.0
        %1851 = vmatprep.subr.mxu0 0.0
        %1852 = vmatpush1.msra.mxu0 0.0
        %1853 = vmatprep.subr.mxu0 0.0
        %1854 = vmatpush1.msra.mxu0 0.0
        %1855 = vmatprep.subr.mxu0 0.0
        %1856 = vmatpush1.msra.mxu0 0.0
        %1857 = vmatprep.subr.mxu0 0.0
        %1858 = vmatpush1.msra.mxu0 0.0
        %1859 = vmatprep.subr.mxu0 0.0
        %1860 = vmatpush1.msra.mxu0 0.0
        %1861 = vmatprep.subr.mxu0 0.0
        %1862 = vmatpush1.msra.mxu0 0.0
        %1863 = vmatprep.subr.mxu0 0.0
        %1864 = vmatpush1.msra.mxu0 0.0
        %1865 = vmatprep.subr.mxu0 0.0
        %1866 = vmatpush1.msra.mxu0 0.0
        %1867 = vmatprep.subr.mxu0 0.0
        %1868 = vmatpush1.msra.mxu0 0.0
        %1869 = vmatprep.subr.mxu0 0.0
        %1870 = vmatpush1.msra.mxu0 0.0
        %1871 = vmatprep.subr.mxu0 0.0
        %1872 = vmatpush1.msra.mxu0 0.0
        %1873 = vmatprep.subr.mxu0 0.0
        %1874 = vmatpush1.msra.mxu0 0.0
        %1875 = vmatprep.subr.mxu0 0.0
        %1876 = vmatpush1.msra.mxu0 0.0
        %1877 = vmatprep.subr.mxu0 0.0
        %1878 = vmatpush1.msra.mxu0 0.0
        %1879 = vmatprep.subr.mxu0 0.0
        %1880 = vmatpush1.msra.mxu0 0.0
        %1881 = vmatprep.subr.mxu0 0.0
        %1882 = vmatpush1.msra.mxu0 0.0
        %1883 = vmatprep.subr.mxu0 0.0
        %1884 = vmatpush1.msra.mxu0 0.0
        %1885 = vmatprep.subr.mxu0 0.0
        %1886 = vmatpush1.msra.mxu0 0.0
        %1887 = vmatprep.subr.mxu0 0.0
        %1888 = vmatpush1.msra.mxu0 0.0
        %1889 = vmatprep.subr.mxu0 0.0
        %1890 = vmatpush1.msra.mxu0 0.0
        %1891 = vmatprep.subr.mxu0 0.0
        %1892 = vmatpush1.msra.mxu0 0.0
        %1893 = vmatprep.subr.mxu0 0.0
        %1894 = vmatpush1.msra.mxu0 0.0
        %1895 = vmatprep.subr.mxu0 0.0
        %1896 = vmatpush1.msra.mxu0 0.0
        %1897 = vmatprep.mubr.f32.mxu0 0.0
        %1898 = vmatmul.mubr.f32.gmra.mrb[0].mxu0 %v1822
        %v1899 = vpop.f32.mrb[0].mxu0
        %v1900 = vadd.f32 0.0, %v1899
        %v1901 = vpop.f32.mrb[0].mxu0
        %v1902 = vadd.f32 0.0, %v1901
        %1903 = vmatprep.mubr.f32.mxu0 0.0
        %1904 = vmatmul.mubr.f32.gmra.mrb[0].mxu0 %v1825
        %v1905 = vpop.f32.mrb[0].mxu0
        %v1906 = vadd.f32 0.0, %v1905
        %v1907 = vpop.f32.mrb[0].mxu0
        %v1908 = vadd.f32 0.0, %v1907
        %1909 = vmatprep.mubr.f32.mxu0 0.0
        %1910 = vmatmul.mubr.f32.gmra.mrb[0].mxu0 %v1828
        %v1911 = vpop.f32.mrb[0].mxu0
        %v1912 = vadd.f32 0.0, %v1911
        %v1913 = vpop.f32.mrb[0].mxu0
        %v1914 = vadd.f32 0.0, %v1913
        %1915 = vmatprep.mubr.f32.mxu0 0.0
        %1916 = vmatmul.mubr.f32.gmra.mrb[0].mxu0 %v1831
        %v1917 = vpop.f32.mrb[0].mxu0
        %v1918 = vadd.f32 0.0, %v1917
        %v1919 = vpop.f32.mrb[0].mxu0
        %v1920 = vadd.f32 0.0, %v1919
        %1921 = vdwg.mxu0
        %v1922 = vmul.f32 %v1607, %v1900
        %v1923 = vmul.f32 %v1608, %v1902
        %v1924 = vmul.f32 %v1609, %v1906
        %v1925 = vmul.f32 %v1610, %v1908
        %v1926 = vmul.f32 %v1611, %v1912
        %v1927 = vmul.f32 %v1612, %v1914
        %v1928 = vmul.f32 %v1613, %v1918
        %v1929 = vmul.f32 %v1614, %v1920
        %1931 = vset.pattern.permute.xlu0 0
        %1932 = vperm.xlu0 %1931, %v1332
        %v1933 = vpop.permute.xlu0 %1932
        %1936 = vset.pattern.permute.xlu0 0
        %1937 = vperm.xlu0 %1936, %v1333
        %v1938 = vpop.permute.xlu0 %1937
        %1941 = vset.pattern.permute.xlu0 0
        %1942 = vperm.xlu0 %1941, %v1334
        %v1943 = vpop.permute.xlu0 %1942
        %1946 = vset.pattern.permute.xlu0 0
        %1947 = vperm.xlu0 %1946, %v1335
        %v1948 = vpop.permute.xlu0 %1947
        %v1950 = vadd.f32 %v1922, %v1933
        %v1951 = vadd.f32 %v1923, %v1933
        %v1952 = vadd.f32 %v1924, %v1938
        %v1953 = vadd.f32 %v1925, %v1938
        %v1954 = vadd.f32 %v1926, %v1943
        %v1955 = vadd.f32 %v1927, %v1943
        %v1956 = vadd.f32 %v1928, %v1948
        %v1957 = vadd.f32 %v1929, %v1948
        %v1958 = vmax.f32 %v1950, 0.0
        %v1959 = vmax.f32 %v1951, 0.0
        %v1960 = vmax.f32 %v1952, 0.0
        %v1961 = vmax.f32 %v1953, 0.0
        %v1962 = vmax.f32 %v1954, 0.0
        %v1963 = vmax.f32 %v1955, 0.0
        %v1964 = vmax.f32 %v1956, 0.0
        %v1965 = vmax.f32 %v1957, 0.0
        %1966 = vrot.lane.b32.xlu0 %v1958, 2
        %v1967 = vpop.permute.xlu0 %1966
        %1968 = vrot.lane.b32.xlu0 %v1960, 2
        %v1969 = vpop.permute.xlu0 %1968
        %1970 = vrot.lane.b32.xlu0 %v1962, 2
        %v1971 = vpop.permute.xlu0 %1970
        %1972 = vrot.lane.b32.xlu0 %v1964, 2
        %v1973 = vpop.permute.xlu0 %1972
        %1974 = vrot.lane.b32.xlu0 %v1959, 2
        %v1975 = vpop.permute.xlu0 %1974
        %1976 = vrot.lane.b32.xlu0 %v1961, 2
        %v1977 = vpop.permute.xlu0 %1976
        %1978 = vrot.lane.b32.xlu0 %v1963, 2
        %v1979 = vpop.permute.xlu0 %1978
        %1980 = vrot.lane.b32.xlu0 %v1965, 2
        %v1981 = vpop.permute.xlu0 %1980
        %v1982 = vsel %vm1164, %v1967, %v1975
        %v1983 = vsel %vm1164, %v1969, %v1977
        %v1984 = vsel %vm1164, %v1971, %v1979
        %v1985 = vsel %vm1164, %v1973, %v1981
        %v1986 = vsel %vm1164, %v1975, %v1967
        %v1987 = vsel %vm1164, %v1977, %v1969
        %v1988 = vsel %vm1164, %v1979, %v1971
        %v1989 = vsel %vm1164, %v1981, %v1973
        %v1990 = vsel %vm1175, %v1986, 0.0
        %v1991 = vsel %vm1176, %v1982, 0.0
        %v1992 = vsel %vm1175, %v1987, 0.0
        %v1993 = vsel %vm1176, %v1983, 0.0
        %v1994 = vsel %vm1175, %v1988, 0.0
        %v1995 = vsel %vm1176, %v1984, 0.0
        %v1996 = vsel %vm1175, %v1989, 0.0
        %v1997 = vsel %vm1176, %v1985, 0.0
        %1998 = vrot.lane.b32.xlu0 %v1958, 126
        %v1999 = vpop.permute.xlu0 %1998
        %2000 = vrot.lane.b32.xlu0 %v1960, 126
        %v2001 = vpop.permute.xlu0 %2000
        %2002 = vrot.lane.b32.xlu0 %v1962, 126
        %v2003 = vpop.permute.xlu0 %2002
        %2004 = vrot.lane.b32.xlu0 %v1964, 126
        %v2005 = vpop.permute.xlu0 %2004
        %2006 = vrot.lane.b32.xlu0 %v1959, 126
        %v2007 = vpop.permute.xlu0 %2006
        %2008 = vrot.lane.b32.xlu0 %v1961, 126
        %v2009 = vpop.permute.xlu0 %2008
        %2010 = vrot.lane.b32.xlu0 %v1963, 126
        %v2011 = vpop.permute.xlu0 %2010
        %2012 = vrot.lane.b32.xlu0 %v1965, 126
        %v2013 = vpop.permute.xlu0 %2012
        %v2014 = vsel %vm1201, %v1999, %v2007
        %v2015 = vsel %vm1201, %v2001, %v2009
        %v2016 = vsel %vm1201, %v2003, %v2011
        %v2017 = vsel %vm1201, %v2005, %v2013
        %v2018 = vsel %vm1201, %v2007, %v1999
        %v2019 = vsel %vm1201, %v2009, %v2001
        %v2020 = vsel %vm1201, %v2011, %v2003
        %v2021 = vsel %vm1201, %v2013, %v2005
        %v2022 = vsel %vm1212, %v2014, 0.0
        %v2023 = vsel %vm1213, %v2018, 0.0
        %v2024 = vsel %vm1212, %v2015, 0.0
        %v2025 = vsel %vm1213, %v2019, 0.0
        %v2026 = vsel %vm1212, %v2016, 0.0
        %v2027 = vsel %vm1213, %v2020, 0.0
        %v2028 = vsel %vm1212, %v2017, 0.0
        %v2029 = vsel %vm1213, %v2021, 0.0
        %v2030 = vld [vmem:[%s9] sm:$0xff]
        %v2031 = vld [vmem:[%s9 + $0x8] sm:$0xff]
        %v2032 = vld [vmem:[%s9 + $0x10] sm:$0xff]
        %v2033 = vld [vmem:[%s9 + $0x18] sm:$0xff]
        %v2035 = vsel %vm1226, %v2030, 0
        %v2038 = vsel %vm1226, %v2031, 0
        %v2041 = vsel %vm1226, %v2032, 0
        %v2044 = vsel %vm1226, %v2033, 0
        %2046 = vmatprep.subr.mxu0 %v1991
        %2047 = vmatpush1.msra.mxu0 %v1990
        %2048 = vmatprep.subr.mxu0 %v1993
        %2049 = vmatpush1.msra.mxu0 %v1992
        %2050 = vmatprep.subr.mxu0 %v1995
        %2051 = vmatpush1.msra.mxu0 %v1994
        %2052 = vmatprep.subr.mxu0 %v1997
        %2053 = vmatpush1.msra.mxu0 %v1996
        %2054 = vmatprep.subr.mxu0 %v1959
        %2055 = vmatpush1.msra.mxu0 %v1958
        %2056 = vmatprep.subr.mxu0 %v1961
        %2057 = vmatpush1.msra.mxu0 %v1960
        %2058 = vmatprep.subr.mxu0 %v1963
        %2059 = vmatpush1.msra.mxu0 %v1962
        %2060 = vmatprep.subr.mxu0 %v1965
        %2061 = vmatpush1.msra.mxu0 %v1964
        %2062 = vmatprep.subr.mxu0 %v2023
        %2063 = vmatpush1.msra.mxu0 %v2022
        %2064 = vmatprep.subr.mxu0 %v2025
        %2065 = vmatpush1.msra.mxu0 %v2024
        %2066 = vmatprep.subr.mxu0 %v2027
        %2067 = vmatpush1.msra.mxu0 %v2026
        %2068 = vmatprep.subr.mxu0 %v2029
        %2069 = vmatpush1.msra.mxu0 %v2028
        %2070 = vmatprep.subr.mxu0 0.0
        %2071 = vmatpush1.msra.mxu0 0.0
        %2072 = vmatprep.subr.mxu0 0.0
        %2073 = vmatpush1.msra.mxu0 0.0
        %2074 = vmatprep.subr.mxu0 0.0
        %2075 = vmatpush1.msra.mxu0 0.0
        %2076 = vmatprep.subr.mxu0 0.0
        %2077 = vmatpush1.msra.mxu0 0.0
        %2078 = vmatprep.subr.mxu0 0.0
        %2079 = vmatpush1.msra.mxu0 0.0
        %2080 = vmatprep.subr.mxu0 0.0
        %2081 = vmatpush1.msra.mxu0 0.0
        %2082 = vmatprep.subr.mxu0 0.0
        %2083 = vmatpush1.msra.mxu0 0.0
        %2084 = vmatprep.subr.mxu0 0.0
        %2085 = vmatpush1.msra.mxu0 0.0
        %2086 = vmatprep.subr.mxu0 0.0
        %2087 = vmatpush1.msra.mxu0 0.0
        %2088 = vmatprep.subr.mxu0 0.0
        %2089 = vmatpush1.msra.mxu0 0.0
        %2090 = vmatprep.subr.mxu0 0.0
        %2091 = vmatpush1.msra.mxu0 0.0
        %2092 = vmatprep.subr.mxu0 0.0
        %2093 = vmatpush1.msra.mxu0 0.0
        %2094 = vmatprep.subr.mxu0 0.0
        %2095 = vmatpush1.msra.mxu0 0.0
        %2096 = vmatprep.subr.mxu0 0.0
        %2097 = vmatpush1.msra.mxu0 0.0
        %2098 = vmatprep.subr.mxu0 0.0
        %2099 = vmatpush1.msra.mxu0 0.0
        %2100 = vmatprep.subr.mxu0 0.0
        %2101 = vmatpush1.msra.mxu0 0.0
        %2102 = vmatprep.subr.mxu0 0.0
        %2103 = vmatpush1.msra.mxu0 0.0
        %2104 = vmatprep.subr.mxu0 0.0
        %2105 = vmatpush1.msra.mxu0 0.0
        %2106 = vmatprep.subr.mxu0 0.0
        %2107 = vmatpush1.msra.mxu0 0.0
        %2108 = vmatprep.subr.mxu0 0.0
        %2109 = vmatpush1.msra.mxu0 0.0
        %2110 = vmatprep.mubr.f32.mxu0 0.0
        %2111 = vmatmul.mubr.f32.gmra.mrb[0].mxu0 %v2035
        %v2112 = vpop.f32.mrb[0].mxu0
        %v2113 = vadd.f32 0.0, %v2112
        %v2114 = vpop.f32.mrb[0].mxu0
        %v2115 = vadd.f32 0.0, %v2114
        %2116 = vmatprep.mubr.f32.mxu0 0.0
        %2117 = vmatmul.mubr.f32.gmra.mrb[0].mxu0 %v2038
        %v2118 = vpop.f32.mrb[0].mxu0
        %v2119 = vadd.f32 0.0, %v2118
        %v2120 = vpop.f32.mrb[0].mxu0
        %v2121 = vadd.f32 0.0, %v2120
        %2122 = vmatprep.mubr.f32.mxu0 0.0
        %2123 = vmatmul.mubr.f32.gmra.mrb[0].mxu0 %v2041
        %v2124 = vpop.f32.mrb[0].mxu0
        %v2125 = vadd.f32 0.0, %v2124
        %v2126 = vpop.f32.mrb[0].mxu0
        %v2127 = vadd.f32 0.0, %v2126
        %2128 = vmatprep.mubr.f32.mxu0 0.0
        %2129 = vmatmul.mubr.f32.gmra.mrb[0].mxu0 %v2044
        %v2130 = vpop.f32.mrb[0].mxu0
        %v2131 = vadd.f32 0.0, %v2130
        %v2132 = vpop.f32.mrb[0].mxu0
        %v2133 = vadd.f32 0.0, %v2132
        %2134 = vdwg.mxu0
        %v2135 = vadd.f32 %v394, %v2113
        %v2136 = vadd.f32 %v395, %v2115
        %v2137 = vadd.f32 %v396, %v2119
        %v2138 = vadd.f32 %v397, %v2121
        %v2139 = vadd.f32 %v398, %v2125
        %v2140 = vadd.f32 %v399, %v2127
        %v2141 = vadd.f32 %v400, %v2131
        %v2142 = vadd.f32 %v401, %v2133
        %2143 = vst [vmem:[%s391] sm:$0xff] %v2135
        %2144 = vst [vmem:[%s391 + $0x8] sm:$0xff] %v2136
        %2145 = vst [vmem:[%s391 + $0x10] sm:$0xff] %v2137
        %2146 = vst [vmem:[%s391 + $0x18] sm:$0xff] %v2138
        %2147 = vst [vmem:[%s391 + $0x20] sm:$0xff] %v2139
        %2148 = vst [vmem:[%s391 + $0x28] sm:$0xff] %v2140
        %2149 = vst [vmem:[%s391 + $0x30] sm:$0xff] %v2141
        %2150 = vst [vmem:[%s391 + $0x38] sm:$0xff] %v2142
        %s2151 = sand.u32 %s247, 1
        %s2152 = scalar_lea.sflag [#allocation4], %s2151
        %s2153 = sand.u32 %s247, 1
        %s2154 = smul.addr %s2153, 64
        %s2155 = scalar_lea.vmem [#allocation3], %s2154
        // Predicated region
        $region84: #{tpu_custom_call.1} parent=78 // pred_check
          %p2156 = pneg %p257
        $region85: #{tpu_custom_call.1} parent=78 // pred_check_branch
          %2158 = sbr.rel (%p2156) target = $region87
        $region86: #{tpu_custom_call.1} parent=78 // pred_region
          %s2159 = smul.u32 2, %s24
          %s2161 = ssub.s32 1024, 1024
          %2162 = vsyncadd %s2152, %s2161
          %s2163 = smul.addr %s2159, 128
          %s2164 = scalar_lea.hbm %s10, %s2163
          %s2165 = sshll.u32 %s2155, 4
          %s2166 = int_to_ptr.vmem [resolvable:$true] %s2165
          %2171 = dma.vmem_to_hbm [thread:$0]  %s2166, 1024, %s2164, %s2152, 256, 512, 16
        $region87: #{tpu_custom_call.1} parent=78 // pred_fallthru
          _
      $region79: #{tpu_custom_call.1} parent=5 // pred_fallthru
        _
      %p2172 = scmp.le.s32.totalorder 2, %s19
      // Predicated region
      $region88: #{tpu_custom_call.1} parent=5 // pred_check
        %p2173 = pneg %p2172
      $region89: #{tpu_custom_call.1} parent=5 // pred_check_branch
        %2175 = sbr.rel (%p2173) target = $region91
      $region90: #{tpu_custom_call.1} parent=5 // pred_region
        %s2176 = ssub.s32 %s19, 2
        // Predicated region
        $region92: #{tpu_custom_call.1} parent=90 // pred_check
          %p2177 = pneg %p263
        $region93: #{tpu_custom_call.1} parent=90 // pred_check_branch
          %2179 = sbr.rel (%p2177) target = $region95
        $region94: #{tpu_custom_call.1} parent=90 // pred_region
          %s2180 = sand.u32 %s248, 1
          %s2181 = scalar_lea.sflag [#allocation4], %s2180
          %s2182 = sand.u32 %s248, 1
          %s2183 = smul.addr %s2182, 64
          %s2184 = scalar_lea.vmem [#allocation3], %s2183
          %2185 = dma.done %s2181, 1024
        $region95: #{tpu_custom_call.1} parent=90 // pred_fallthru
          _
      $region91: #{tpu_custom_call.1} parent=5 // pred_fallthru
        _
    $region6: #{tpu_custom_call.1} parent=1 // loop_footer
      %s23 = sadd.s32 1, %s19
    $region7: #{tpu_custom_call.1} parent=1 // loop_footer_branch
      %18 = sbr.rel target = $region3
    $region8: #{tpu_custom_call.1} parent=1 // loop_exit
      _
    %2186 = vsyncpa [#allocation4], 1
    %s2187 = scalar_lea.sflag [#allocation4], 1
    %2188 = vsyncpa %s2187, 1

</llo_original>
